<compile_context>
chip_gen: v7x
topology: tpu7x:2x2x1
jax: 0.10.0
libtpu: 0.0.40
codegen_flags: <defaults>
</compile_context>

<pallas_src>
import jax
import jax.numpy as jnp
from jax import lax
from jax.experimental import pallas as pl
from jax.experimental.pallas import tpu as pltpu

STATE_SIZE = 3
ACTION_SIZE = 1
HIDDEN = (400, 300)
STATE_PAD = 8                # state features zero-padded to one full sublane group
DEFAULT_BATCH_TILE = 1024    # lane-axis batch rows per grid step (multiple of 128)


def _cdiv(a, b):
    return -(-a // b)


def critic_kernel(s_ref, a_ref, w1t_ref, b1_ref, w2at_ref, w2b_ref, b2_ref,
                  w3_ref, b3_ref, out_ref):
    """Transposed pipeline: batch on the lane axis.

    s_ref   : (STATE_PAD, TB) bf16  state^T (zero-padded features)
    a_ref   : (1, TB)         f32   action^T
    w1t_ref : (H1, STATE_PAD) bf16  fc1 weight^T (zero-padded columns)
    b1_ref  : (H1, 1)         f32
    w2at_ref: (H2, H1)        bf16  fc2 weight^T, state half of the concat
    w2b_ref : (H2, 1)         f32   fc2 weight^T, action column
    b2_ref  : (H2, 1)         f32
    w3_ref  : (1, H2)         bf16
    b3_ref  : (1, 1)          f32
    out_ref : (1, TB)         f32   q^T (lane-dense output)
    """
    # fc1 + relu:  xs^T = relu(W1^T @ s^T + b1)                 (H1, TB), f32 acc
    xs = jnp.dot(w1t_ref[...], s_ref[...], preferred_element_type=jnp.float32)
    xs = jnp.maximum(xs + b1_ref[...], 0.0)

    # fc2 + relu (concat folded): h^T = relu(W2a^T @ xs^T + w2b * a^T + b2)
    h = jnp.dot(w2at_ref[...], xs.astype(jnp.bfloat16),
                preferred_element_type=jnp.float32)
    h = h + w2b_ref[...] * a_ref[...]              # rank-1 action term (VPU)
    h = jnp.maximum(h + b2_ref[...], 0.0)          # (H2, TB)

    # fc3: q^T = w3 @ h^T + b3  -> (1, TB); batch stays on the lane axis.
    q = jnp.dot(w3_ref[...], h.astype(jnp.bfloat16),
                preferred_element_type=jnp.float32)
    out_ref[...] = q + b3_ref[...]


def critic_forward(state, action, kparams, *, batch_tile=DEFAULT_BATCH_TILE):
    """state: (B, state_size) f32, action: (B, action_size) f32 -> (B, 1) f32."""
    w1t, b1, w2at, w2b, b2, w3r, b3 = kparams
    B, S = state.shape
    A = action.shape[1]
    H1, SP = w1t.shape
    H2 = w2at.shape[0]

    # --- batch tiling on the lane axis (granularity 128) ---------------------
    b128 = _cdiv(B, 128) * 128
    n_steps = max(1, _cdiv(b128, batch_tile))
    if n_steps == 1 and b128 >= 2 * 128:
        n_steps = 2          # v7x: >=2 grid steps so both TensorCores get work
    tile = _cdiv(_cdiv(b128, n_steps), 128) * 128
    b_pad = n_steps * tile

    # --- transposed, padded, lane-dense inputs (layout plumbing only) --------
    s_t = jnp.zeros((SP, b_pad), jnp.float32).at[:S, :B].set(state.T)
    s_t = s_t.astype(jnp.bfloat16)                                   # (SP, b_pad)
    a_t = jnp.zeros((A, b_pad), jnp.float32).at[:, :B].set(action.T)  # (A, b_pad)

    def tiled(rows):
        return pl.BlockSpec((rows, tile), lambda i: (0, i))

    def resident(shape):  # same block every step -> DMA'd once, stays in VMEM
        return pl.BlockSpec(shape, lambda i: (0, 0))

    flops = 2 * B * (S * H1 + (H1 + A) * H2 + H2)
    bytes_accessed = (2 * SP * b_pad + 4 * A * b_pad + 4 * b_pad     # acts in/out
                      + 2 * (H1 * SP + H2 * H1 + H2)                 # bf16 weights
                      + 4 * (H1 + 3 * H2 + 1))                       # f32 vectors

    out = pl.pallas_call(
        critic_kernel,
        out_shape=jax.ShapeDtypeStruct((1, b_pad), jnp.float32),
        grid_spec=pltpu.PrefetchScalarGridSpec(
            num_scalar_prefetch=0,
            grid=(n_steps,),
            in_specs=[
                tiled(SP),              # state^T   (SP, TB)  bf16
                tiled(A),               # action^T  (1, TB)   f32
                resident((H1, SP)),     # W1^T      bf16
                resident((H1, 1)),      # b1        f32
                resident((H2, H1)),     # W2a^T     bf16
                resident((H2, 1)),      # w2b col   f32
                resident((H2, 1)),      # b2        f32
                resident((1, H2)),      # w3 row    bf16
                resident((1, 1)),       # b3        f32
            ],
            out_specs=pl.BlockSpec((1, tile), lambda i: (0, i)),
        ),
        compiler_params=pltpu.CompilerParams(
            dimension_semantics=("parallel",)),
        cost_estimate=pl.CostEstimate(flops=flops, transcendentals=0,
                                      bytes_accessed=bytes_accessed),
    )(s_t, a_t, w1t, b1, w2at, w2b, b2, w3r, b3)

    return out[0, :B].reshape(B, 1)   # padded batch columns are sliced off here


def init_params(key, state_size=STATE_SIZE, action_size=ACTION_SIZE, hidden=HIDDEN):
    """f32 params mirroring the module's reset_parameters(): kaiming-uniform
    (fan_in, relu) for fc1/fc2 weights, U(-3e-3, 3e-3) for the fc3 weight, and
    PyTorch-default U(-1/sqrt(fan_in), 1/sqrt(fan_in)) biases.  Weights stored
    as (in_features, out_features) so the reference does plain x @ W."""
    h1, h2 = hidden
    k1, k2, k3, kb1, kb2, kb3 = jax.random.split(key, 6)

    def kaiming_uniform(k, fan_in, fan_out):
        bound = jnp.sqrt(6.0 / fan_in)   # gain=sqrt(2), bound=gain*sqrt(3/fan_in)
        return jax.random.uniform(k, (fan_in, fan_out), jnp.float32, -bound, bound)

    def bias_uniform(k, fan_in, n):
        bound = 1.0 / jnp.sqrt(fan_in)
        return jax.random.uniform(k, (n,), jnp.float32, -bound, bound)

    w1 = kaiming_uniform(k1, state_size, h1)                 # (3, 400)
    w2 = kaiming_uniform(k2, h1 + action_size, h2)           # (401, 300)
    w3 = jax.random.uniform(k3, (h2, 1), jnp.float32, -3e-3, 3e-3)
    b1 = bias_uniform(kb1, state_size, h1)
    b2 = bias_uniform(kb2, h1 + action_size, h2)
    b3 = bias_uniform(kb3, h2, 1)
    return w1, b1, w2, b2, w3, b3


def prepare_kernel_params(params):
    """Kernel layout: transposed weights, concat split into (W2a^T | w2b col),
    bf16 MXU operands, state features zero-padded to STATE_PAD columns."""
    w1, b1, w2, b2, w3, b3 = params
    s, h1 = w1.shape
    h2 = w2.shape[1]
    w1t = jnp.zeros((h1, STATE_PAD), jnp.float32).at[:, :s].set(w1.T)
    return (
        w1t.astype(jnp.bfloat16),            # (H1, SP)   bf16
        b1.reshape(h1, 1),                   # (H1, 1)    f32
        w2[:h1, :].T.astype(jnp.bfloat16),   # (H2, H1)   bf16
        w2[h1:, :].T,                        # (H2, A=1)  f32
        b2.reshape(h2, 1),                   # (H2, 1)    f32
        w3.T.astype(jnp.bfloat16),           # (1, H2)    bf16
        b3.reshape(1, 1),                    # (1, 1)     f32
    )


def reference_forward(state, action, params):
    """Pure-JAX f32 reference matching the PyTorch forward (explicit concat)."""
    w1, b1, w2, b2, w3, b3 = params
    hp = lax.Precision.HIGHEST
    xs = jax.nn.relu(jnp.dot(state, w1, precision=hp) + b1)
    x = jnp.concatenate([xs, action], axis=1)
    h = jax.nn.relu(jnp.dot(x, w2, precision=hp) + b2)
    return jnp.dot(h, w3, precision=hp) + b3


if __name__ == "__main__":
    key = jax.random.PRNGKey(0)
    kp, ks, ka = jax.random.split(key, 3)

    params = init_params(kp)
    kparams = prepare_kernel_params(params)

    B = 8
    state = jax.random.normal(ks, (B, STATE_SIZE), jnp.float32)
    action = jax.random.normal(ka, (B, ACTION_SIZE), jnp.float32)

    fwd = jax.jit(lambda s, a: critic_forward(s, a, kparams))
    q = jax.block_until_ready(fwd(state, action))

    q_ref = reference_forward(state, action, params)
    assert q.shape == (B, 1)
    err = float(jnp.max(jnp.abs(q - q_ref)))
    # bf16 MXU operands with f32 accumulation -> ~1e-3-level differences vs the
    # exact f32 reference; tolerance relaxed accordingly (per perf review).
    assert err < 2e-2, err

    print("KERNEL_OK")
</pallas_src>

<mosaic_0001>
module attributes {stable_mosaic.version = 11 : i64} {
  func.func @critic_kernel(%arg0: i32, %arg1: memref<8x128xbf16, #tpu.memory_space<vmem>>, %arg2: memref<1x128xf32, #tpu.memory_space<vmem>>, %arg3: memref<400x8xbf16, #tpu.memory_space<vmem>>, %arg4: memref<400x1xf32, #tpu.memory_space<vmem>>, %arg5: memref<300x400xbf16, #tpu.memory_space<vmem>>, %arg6: memref<300x1xf32, #tpu.memory_space<vmem>>, %arg7: memref<300x1xf32, #tpu.memory_space<vmem>>, %arg8: memref<1x300xbf16, #tpu.memory_space<vmem>>, %arg9: memref<1x1xf32, #tpu.memory_space<vmem>>, %arg10: memref<1x128xf32, #tpu.memory_space<vmem>>) attributes {dimension_semantics = [#tpu.dimension_semantics<parallel>], iteration_bounds = array<i64: 1>, scalar_prefetch = 0 : i64, scratch_operands = 0 : i64, tpu.core_type = #tpu.core_type<tc>, window_params = [{transform_indices = @transform_0, window_bounds = array<i64: 8, 128>}, {transform_indices = @transform_1, window_bounds = array<i64: 1, 128>}, {pipeline_mode = #tpu.pipeline_mode<synchronous>, transform_indices = @transform_2, window_bounds = array<i64: 400, 8>}, {pipeline_mode = #tpu.pipeline_mode<synchronous>, transform_indices = @transform_3, window_bounds = array<i64: 400, 1>}, {pipeline_mode = #tpu.pipeline_mode<synchronous>, transform_indices = @transform_4, window_bounds = array<i64: 300, 400>}, {pipeline_mode = #tpu.pipeline_mode<synchronous>, transform_indices = @transform_5, window_bounds = array<i64: 300, 1>}, {pipeline_mode = #tpu.pipeline_mode<synchronous>, transform_indices = @transform_6, window_bounds = array<i64: 300, 1>}, {pipeline_mode = #tpu.pipeline_mode<synchronous>, transform_indices = @transform_7, window_bounds = array<i64: 1, 300>}, {pipeline_mode = #tpu.pipeline_mode<synchronous>, transform_indices = @transform_8, window_bounds = array<i64: 1, 1>}, {transform_indices = @transform_9, window_bounds = array<i64: 1, 128>}]} {
    %c0 = arith.constant 0 : index
    %c0_0 = arith.constant 0 : index
    %0 = vector.load %arg3[%c0, %c0_0] : memref<400x8xbf16, #tpu.memory_space<vmem>>, vector<400x8xbf16>
    %c0_1 = arith.constant 0 : index
    %c0_2 = arith.constant 0 : index
    %1 = vector.load %arg1[%c0_1, %c0_2] : memref<8x128xbf16, #tpu.memory_space<vmem>>, vector<8x128xbf16>
    %cst = arith.constant dense<0.000000e+00> : vector<400x128xf32>
    %2 = tpu.matmul %0, %1, %cst {dimension_numbers = #tpu.dot_dimension_numbers<[1], [0], [0], [1], [0, 0, 1, 1], [], []>} : vector<400x8xbf16>, vector<8x128xbf16>, vector<400x128xf32> -> vector<400x128xf32>
    %c0_3 = arith.constant 0 : index
    %c0_4 = arith.constant 0 : index
    %3 = vector.load %arg4[%c0_3, %c0_4] : memref<400x1xf32, #tpu.memory_space<vmem>>, vector<400x1xf32>
    %4 = vector.broadcast %3 : vector<400x1xf32> to vector<400x128xf32>
    %5 = arith.addf %2, %4 : vector<400x128xf32>
    %cst_5 = arith.constant 0.000000e+00 : f32
    %6 = vector.broadcast %cst_5 : f32 to vector<400x128xf32>
    %7 = arith.maximumf %5, %6 : vector<400x128xf32>
    %c0_6 = arith.constant 0 : index
    %c0_7 = arith.constant 0 : index
    %8 = vector.load %arg5[%c0_6, %c0_7] : memref<300x400xbf16, #tpu.memory_space<vmem>>, vector<300x400xbf16>
    %9 = arith.truncf %7 : vector<400x128xf32> to vector<400x128xbf16>
    %cst_8 = arith.constant dense<0.000000e+00> : vector<300x128xf32>
    %10 = tpu.matmul %8, %9, %cst_8 {dimension_numbers = #tpu.dot_dimension_numbers<[1], [0], [0], [1], [0, 0, 1, 1], [], []>} : vector<300x400xbf16>, vector<400x128xbf16>, vector<300x128xf32> -> vector<300x128xf32>
    %c0_9 = arith.constant 0 : index
    %c0_10 = arith.constant 0 : index
    %11 = vector.load %arg6[%c0_9, %c0_10] : memref<300x1xf32, #tpu.memory_space<vmem>>, vector<300x1xf32>
    %c0_11 = arith.constant 0 : index
    %c0_12 = arith.constant 0 : index
    %12 = vector.load %arg2[%c0_11, %c0_12] : memref<1x128xf32, #tpu.memory_space<vmem>>, vector<1x128xf32>
    %13 = vector.broadcast %11 : vector<300x1xf32> to vector<300x128xf32>
    %14 = vector.broadcast %12 : vector<1x128xf32> to vector<300x128xf32>
    %15 = arith.mulf %13, %14 : vector<300x128xf32>
    %16 = arith.addf %10, %15 : vector<300x128xf32>
    %c0_13 = arith.constant 0 : index
    %c0_14 = arith.constant 0 : index
    %17 = vector.load %arg7[%c0_13, %c0_14] : memref<300x1xf32, #tpu.memory_space<vmem>>, vector<300x1xf32>
    %18 = vector.broadcast %17 : vector<300x1xf32> to vector<300x128xf32>
    %19 = arith.addf %16, %18 : vector<300x128xf32>
    %cst_15 = arith.constant 0.000000e+00 : f32
    %20 = vector.broadcast %cst_15 : f32 to vector<300x128xf32>
    %21 = arith.maximumf %19, %20 : vector<300x128xf32>
    %c0_16 = arith.constant 0 : index
    %c0_17 = arith.constant 0 : index
    %22 = vector.load %arg8[%c0_16, %c0_17] : memref<1x300xbf16, #tpu.memory_space<vmem>>, vector<1x300xbf16>
    %23 = arith.truncf %21 : vector<300x128xf32> to vector<300x128xbf16>
    %cst_18 = arith.constant dense<0.000000e+00> : vector<1x128xf32>
    %24 = tpu.matmul %22, %23, %cst_18 {dimension_numbers = #tpu.dot_dimension_numbers<[1], [0], [0], [1], [0, 0, 1, 1], [], []>} : vector<1x300xbf16>, vector<300x128xbf16>, vector<1x128xf32> -> vector<1x128xf32>
    %c0_19 = arith.constant 0 : index
    %c0_20 = arith.constant 0 : index
    %25 = vector.load %arg9[%c0_19, %c0_20] : memref<1x1xf32, #tpu.memory_space<vmem>>, vector<1x1xf32>
    %26 = vector.broadcast %25 : vector<1x1xf32> to vector<1x128xf32>
    %27 = arith.addf %24, %26 : vector<1x128xf32>
    %c0_21 = arith.constant 0 : index
    %c0_22 = arith.constant 0 : index
    %28 = vector.load %arg10[%c0_21, %c0_22] : memref<1x128xf32, #tpu.memory_space<vmem>>, vector<1x128xf32>
    tpu.vector_store %arg10[%c0_21, %c0_22], %27 {strides = array<i32>} : memref<1x128xf32, #tpu.memory_space<vmem>>, vector<1x128xf32>,
    return
  }
  func.func @transform_0(%arg0: i32) -> (i32, i32) {
    %c0_i32 = arith.constant 0 : i32
    %c0_i32_0 = arith.constant 0 : i32
    return %c0_i32, %arg0 : i32, i32
  }
  func.func @transform_1(%arg0: i32) -> (i32, i32) {
    %c0_i32 = arith.constant 0 : i32
    %c0_i32_0 = arith.constant 0 : i32
    return %c0_i32, %arg0 : i32, i32
  }
  func.func @transform_2(%arg0: i32) -> (i32, i32) {
    %c0_i32 = arith.constant 0 : i32
    %c0_i32_0 = arith.constant 0 : i32
    %c0_i32_1 = arith.constant 0 : i32
    return %c0_i32, %c0_i32_0 : i32, i32
  }
  func.func @transform_3(%arg0: i32) -> (i32, i32) {
    %c0_i32 = arith.constant 0 : i32
    %c0_i32_0 = arith.constant 0 : i32
    %c0_i32_1 = arith.constant 0 : i32
    return %c0_i32, %c0_i32_0 : i32, i32
  }
  func.func @transform_4(%arg0: i32) -> (i32, i32) {
    %c0_i32 = arith.constant 0 : i32
    %c0_i32_0 = arith.constant 0 : i32
    %c0_i32_1 = arith.constant 0 : i32
    return %c0_i32, %c0_i32_0 : i32, i32
  }
  func.func @transform_5(%arg0: i32) -> (i32, i32) {
    %c0_i32 = arith.constant 0 : i32
    %c0_i32_0 = arith.constant 0 : i32
    %c0_i32_1 = arith.constant 0 : i32
    return %c0_i32, %c0_i32_0 : i32, i32
  }
  func.func @transform_6(%arg0: i32) -> (i32, i32) {
    %c0_i32 = arith.constant 0 : i32
    %c0_i32_0 = arith.constant 0 : i32
    %c0_i32_1 = arith.constant 0 : i32
    return %c0_i32, %c0_i32_0 : i32, i32
  }
  func.func @transform_7(%arg0: i32) -> (i32, i32) {
    %c0_i32 = arith.constant 0 : i32
    %c0_i32_0 = arith.constant 0 : i32
    %c0_i32_1 = arith.constant 0 : i32
    return %c0_i32, %c0_i32_0 : i32, i32
  }
  func.func @transform_8(%arg0: i32) -> (i32, i32) {
    %c0_i32 = arith.constant 0 : i32
    %c0_i32_0 = arith.constant 0 : i32
    %c0_i32_1 = arith.constant 0 : i32
    return %c0_i32, %c0_i32_0 : i32, i32
  }
  func.func @transform_9(%arg0: i32) -> (i32, i32) {
    %c0_i32 = arith.constant 0 : i32
    %c0_i32_0 = arith.constant 0 : i32
    return %c0_i32, %arg0 : i32, i32
  }
}

</mosaic_0001>

<llo_original>
// kernel: _lambda_.1
$region0: #{_lambda_.1}
  #allocation0 [shape = 'u32[]', space=smem, size = 0x4, offset = 0x4, fixed_abs, tag = 'smem constant byte address 0x4 - core index']
  #allocation1 [shape = 'u32[144,128]{1,0:T(1,128)}', space=vmem, size = 0x12000, scoped, tag = 'internal scratch']
  #allocation2 [shape = 'f32[1,1]{1,0:T(1,128)S(1)}', space=vmem, size = 0x200, scoped, tag = 'scoped memory for _lambda_.1']
  %s0 = inlined_call_operand.vmem [shape: bf16[8,128], index: 0, kind: input, shape index: {}]
  %s1 = inlined_call_operand.vmem [shape: f32[1,128], index: 1, kind: input, shape index: {}]
  %s2 = inlined_call_operand.hbm [shape: bf16[400,8], index: 2, kind: input, shape index: {}]
  %s3 = inlined_call_operand.hbm [shape: f32[400,1], index: 3, kind: input, shape index: {}]
  %s4 = inlined_call_operand.hbm [shape: bf16[300,400], index: 4, kind: input, shape index: {}]
  %s5 = inlined_call_operand.hbm [shape: f32[300,1], index: 5, kind: input, shape index: {}]
  %s6 = inlined_call_operand.hbm [shape: f32[300,1], index: 6, kind: input, shape index: {}]
  %s7 = inlined_call_operand.vmem [shape: bf16[1,300], index: 7, kind: input, shape index: {}]
  %s8 = inlined_call_operand.<no memory space> [shape: f32[1,1], index: 8, kind: input, shape index: {}]
  %s9 = inlined_call_operand.vmem [shape: f32[1,128], index: 9, kind: output, shape index: {}]
  %s10 = sld [smem:[#allocation0]]
  $region66: #{_lambda_.1} parent=0
    _
  %s12 = ssub.s32 1, %s10
  %s13 = scalar_select 0, %s12, %s10
  %v14 = vstv %s8
  %15 = vst [vmem:[#allocation2] sm:$0x1] %v14
  $region1: #{_lambda_.1} parent=0
    #allocation3 [shape = 'u8[102400]{0}', space=vmem, size = 0x19000, scoped, tag = 'input window, operand 2, single buffered']
    #allocation4 [shape = 's32[1]{0}', space=sflag, size = 0x4, scoped, tag = 'scoped memory for _lambda_.1']
    #allocation5 [shape = 'u8[204800]{0}', space=vmem, size = 0x32000, scoped, tag = 'input window, operand 3, single buffered']
    #allocation6 [shape = 's32[1]{0}', space=sflag, size = 0x4, scoped, tag = 'scoped memory for _lambda_.1']
    #allocation7 [shape = 'u8[311296]{0}', space=vmem, size = 0x4c000, scoped, tag = 'input window, operand 4, single buffered']
    #allocation8 [shape = 'u8[155648]{0}', space=vmem, size = 0x26000, scoped, tag = 'input window, operand 5, single buffered']
    #allocation9 [shape = 's32[1]{0}', space=sflag, size = 0x4, scoped, tag = 'scoped memory for _lambda_.1']
    #allocation10 [shape = 'u8[155648]{0}', space=vmem, size = 0x26000, scoped, tag = 'input window, operand 6, single buffered']
    %16 = vsyncpa [#allocation4], 0
    %17 = vsyncpa [#allocation6], 0
    %18 = vsyncpa [#allocation9], 0
    // Predicated region
    $region2: #{_lambda_.1} parent=1 // pred_check
      _
    $region3: #{_lambda_.1} parent=1 // pred_check_branch
      %20 = sbr.rel (0) target = $region5
    $region4: #{_lambda_.1} parent=1 // pred_region
      _
    $region5: #{_lambda_.1} parent=1 // pred_fallthru
      _
    // Predicated region
    $region6: #{_lambda_.1} parent=1 // pred_check
      _
    $region7: #{_lambda_.1} parent=1 // pred_check_branch
      %22 = sbr.rel (0) target = $region9
    $region8: #{_lambda_.1} parent=1 // pred_region
      _
    $region9: #{_lambda_.1} parent=1 // pred_fallthru
      _
    // Predicated region
    $region10: #{_lambda_.1} parent=1 // pred_check
      _
    $region11: #{_lambda_.1} parent=1 // pred_check_branch
      %24 = sbr.rel (0) target = $region13
    $region12: #{_lambda_.1} parent=1 // pred_region
      %s26 = ssub.s32 3200, 3200
      %27 = vsyncadd [#allocation4], %s26
      %s28 = sshll.u32 [#allocation3], 4
      %s29 = int_to_ptr.vmem [resolvable:$true] %s28
      %34 = dma.hbm_to_vmem [thread:$0]  %s2, 3200, %s29, [#allocation4], 64, 64, 4
    $region13: #{_lambda_.1} parent=1 // pred_fallthru
      _
    // Predicated region
    $region14: #{_lambda_.1} parent=1 // pred_check
      _
    $region15: #{_lambda_.1} parent=1 // pred_check_branch
      %36 = sbr.rel (0) target = $region17
    $region16: #{_lambda_.1} parent=1 // pred_region
      %s38 = ssub.s32 6400, 6400
      %39 = vsyncadd [#allocation6], %s38
      %s40 = sshll.u32 [#allocation5], 4
      %s41 = int_to_ptr.vmem [resolvable:$true] %s40
      %46 = dma.hbm_to_vmem [thread:$0]  %s3, 6400, %s41, [#allocation6], 128, 128, 8
    $region17: #{_lambda_.1} parent=1 // pred_fallthru
      _
    // Predicated region
    $region18: #{_lambda_.1} parent=1 // pred_check
      _
    $region19: #{_lambda_.1} parent=1 // pred_check_branch
      %48 = sbr.rel (0) target = $region21
    $region20: #{_lambda_.1} parent=1 // pred_region
      %s50 = ssub.s32 9728, 9728
      %51 = vsyncadd [#allocation6], %s50
      %s52 = sshll.u32 [#allocation7], 4
      %s53 = int_to_ptr.vmem [resolvable:$true] %s52
      %58 = dma.hbm_to_vmem [thread:$0]  %s4, 9728, %s53, [#allocation6], 256, 256, 16
    $region21: #{_lambda_.1} parent=1 // pred_fallthru
      _
    // Predicated region
    $region22: #{_lambda_.1} parent=1 // pred_check
      _
    $region23: #{_lambda_.1} parent=1 // pred_check_branch
      %60 = sbr.rel (0) target = $region25
    $region24: #{_lambda_.1} parent=1 // pred_region
      %s62 = ssub.s32 4864, 4864
      %63 = vsyncadd [#allocation9], %s62
      %s64 = sshll.u32 [#allocation8], 4
      %s65 = int_to_ptr.vmem [resolvable:$true] %s64
      %70 = dma.hbm_to_vmem [thread:$0]  %s5, 4864, %s65, [#allocation9], 128, 128, 8
    $region25: #{_lambda_.1} parent=1 // pred_fallthru
      _
    // Predicated region
    $region26: #{_lambda_.1} parent=1 // pred_check
      _
    $region27: #{_lambda_.1} parent=1 // pred_check_branch
      %72 = sbr.rel (0) target = $region29
    $region28: #{_lambda_.1} parent=1 // pred_region
      %s74 = ssub.s32 4864, 4864
      %75 = vsyncadd [#allocation9], %s74
      %s76 = sshll.u32 [#allocation10], 4
      %s77 = int_to_ptr.vmem [resolvable:$true] %s76
      %82 = dma.hbm_to_vmem [thread:$0]  %s6, 4864, %s77, [#allocation9], 128, 128, 8
    $region29: #{_lambda_.1} parent=1 // pred_fallthru
      _
    // Predicated region
    $region30: #{_lambda_.1} parent=1 // pred_check
      _
    $region31: #{_lambda_.1} parent=1 // pred_check_branch
      %84 = sbr.rel (0) target = $region33
    $region32: #{_lambda_.1} parent=1 // pred_region
      _
    $region33: #{_lambda_.1} parent=1 // pred_fallthru
      _
    // Predicated region
    $region34: #{_lambda_.1} parent=1 // pred_check
      _
    $region35: #{_lambda_.1} parent=1 // pred_check_branch
      %86 = sbr.rel (0) target = $region37
    $region36: #{_lambda_.1} parent=1 // pred_region
      _
    $region37: #{_lambda_.1} parent=1 // pred_fallthru
      _
    // Predicated region
    $region38: #{_lambda_.1} parent=1 // pred_check
      _
    $region39: #{_lambda_.1} parent=1 // pred_check_branch
      %88 = sbr.rel (0) target = $region41
    $region40: #{_lambda_.1} parent=1 // pred_region
      %89 = dma.done [#allocation4], 3200
    $region41: #{_lambda_.1} parent=1 // pred_fallthru
      _
    // Predicated region
    $region42: #{_lambda_.1} parent=1 // pred_check
      _
    $region43: #{_lambda_.1} parent=1 // pred_check_branch
      %91 = sbr.rel (0) target = $region45
    $region44: #{_lambda_.1} parent=1 // pred_region
      %92 = dma.done [#allocation6], 6400
    $region45: #{_lambda_.1} parent=1 // pred_fallthru
      _
    // Predicated region
    $region46: #{_lambda_.1} parent=1 // pred_check
      _
    $region47: #{_lambda_.1} parent=1 // pred_check_branch
      %94 = sbr.rel (0) target = $region49
    $region48: #{_lambda_.1} parent=1 // pred_region
      %95 = dma.done [#allocation6], 9728
    $region49: #{_lambda_.1} parent=1 // pred_fallthru
      _
    // Predicated region
    $region50: #{_lambda_.1} parent=1 // pred_check
      _
    $region51: #{_lambda_.1} parent=1 // pred_check_branch
      %97 = sbr.rel (0) target = $region53
    $region52: #{_lambda_.1} parent=1 // pred_region
      %98 = dma.done [#allocation9], 4864
    $region53: #{_lambda_.1} parent=1 // pred_fallthru
      _
    // Predicated region
    $region54: #{_lambda_.1} parent=1 // pred_check
      _
    $region55: #{_lambda_.1} parent=1 // pred_check_branch
      %100 = sbr.rel (0) target = $region57
    $region56: #{_lambda_.1} parent=1 // pred_region
      %101 = dma.done [#allocation9], 4864
    $region57: #{_lambda_.1} parent=1 // pred_fallthru
      _
    %v103 = vld [vmem:[#allocation3] sm:$0xf]
    %v104 = vld [vmem:[#allocation3 + $0x4] sm:$0xf]
    %v105 = vld [vmem:[#allocation3 + $0x8] sm:$0xf]
    %v106 = vld [vmem:[#allocation3 + $0xc] sm:$0xf]
    %v107 = vld [vmem:[#allocation3 + $0x10] sm:$0xf]
    %v108 = vld [vmem:[#allocation3 + $0x14] sm:$0xf]
    %v109 = vld [vmem:[#allocation3 + $0x18] sm:$0xf]
    %v110 = vld [vmem:[#allocation3 + $0x1c] sm:$0xf]
    %v111 = vld [vmem:[#allocation3 + $0x20] sm:$0xf]
    %v112 = vld [vmem:[#allocation3 + $0x24] sm:$0xf]
    %v113 = vld [vmem:[#allocation3 + $0x28] sm:$0xf]
    %v114 = vld [vmem:[#allocation3 + $0x2c] sm:$0xf]
    %v115 = vld [vmem:[#allocation3 + $0x30] sm:$0xf]
    %v116 = vld [vmem:[#allocation3 + $0x34] sm:$0xf]
    %v117 = vld [vmem:[#allocation3 + $0x38] sm:$0xf]
    %v118 = vld [vmem:[#allocation3 + $0x3c] sm:$0xf]
    %v119 = vld [vmem:[#allocation3 + $0x40] sm:$0xf]
    %v120 = vld [vmem:[#allocation3 + $0x44] sm:$0xf]
    %v121 = vld [vmem:[#allocation3 + $0x48] sm:$0xf]
    %v122 = vld [vmem:[#allocation3 + $0x4c] sm:$0xf]
    %v123 = vld [vmem:[#allocation3 + $0x50] sm:$0xf]
    %v124 = vld [vmem:[#allocation3 + $0x54] sm:$0xf]
    %v125 = vld [vmem:[#allocation3 + $0x58] sm:$0xf]
    %v126 = vld [vmem:[#allocation3 + $0x5c] sm:$0xf]
    %v127 = vld [vmem:[#allocation3 + $0x60] sm:$0xf]
    %v128 = vld [vmem:[#allocation3 + $0x64] sm:$0xf]
    %v129 = vld [vmem:[#allocation3 + $0x68] sm:$0xf]
    %v130 = vld [vmem:[#allocation3 + $0x6c] sm:$0xf]
    %v131 = vld [vmem:[#allocation3 + $0x70] sm:$0xf]
    %v132 = vld [vmem:[#allocation3 + $0x74] sm:$0xf]
    %v133 = vld [vmem:[#allocation3 + $0x78] sm:$0xf]
    %v134 = vld [vmem:[#allocation3 + $0x7c] sm:$0xf]
    %v135 = vld [vmem:[#allocation3 + $0x80] sm:$0xf]
    %v136 = vld [vmem:[#allocation3 + $0x84] sm:$0xf]
    %v137 = vld [vmem:[#allocation3 + $0x88] sm:$0xf]
    %v138 = vld [vmem:[#allocation3 + $0x8c] sm:$0xf]
    %v139 = vld [vmem:[#allocation3 + $0x90] sm:$0xf]
    %v140 = vld [vmem:[#allocation3 + $0x94] sm:$0xf]
    %v141 = vld [vmem:[#allocation3 + $0x98] sm:$0xf]
    %v142 = vld [vmem:[#allocation3 + $0x9c] sm:$0xf]
    %v143 = vld [vmem:[#allocation3 + $0xa0] sm:$0xf]
    %v144 = vld [vmem:[#allocation3 + $0xa4] sm:$0xf]
    %v145 = vld [vmem:[#allocation3 + $0xa8] sm:$0xf]
    %v146 = vld [vmem:[#allocation3 + $0xac] sm:$0xf]
    %v147 = vld [vmem:[#allocation3 + $0xb0] sm:$0xf]
    %v148 = vld [vmem:[#allocation3 + $0xb4] sm:$0xf]
    %v149 = vld [vmem:[#allocation3 + $0xb8] sm:$0xf]
    %v150 = vld [vmem:[#allocation3 + $0xbc] sm:$0xf]
    %v151 = vld [vmem:[#allocation3 + $0xc0] sm:$0xf]
    %v152 = vld [vmem:[#allocation3 + $0xc4] sm:$0xf]
    %v153 = vld [vmem:[%s0] sm:$0xf]
    %v154 = vld [vmem:[#allocation5] sm:$0xff]
    %v155 = vld [vmem:[#allocation5 + $0x8] sm:$0xff]
    %v156 = vld [vmem:[#allocation5 + $0x10] sm:$0xff]
    %v157 = vld [vmem:[#allocation5 + $0x18] sm:$0xff]
    %v158 = vld [vmem:[#allocation5 + $0x20] sm:$0xff]
    %v159 = vld [vmem:[#allocation5 + $0x28] sm:$0xff]
    %v160 = vld [vmem:[#allocation5 + $0x30] sm:$0xff]
    %v161 = vld [vmem:[#allocation5 + $0x38] sm:$0xff]
    %v162 = vld [vmem:[#allocation5 + $0x40] sm:$0xff]
    %v163 = vld [vmem:[#allocation5 + $0x48] sm:$0xff]
    %v164 = vld [vmem:[#allocation5 + $0x50] sm:$0xff]
    %v165 = vld [vmem:[#allocation5 + $0x58] sm:$0xff]
    %v166 = vld [vmem:[#allocation5 + $0x60] sm:$0xff]
    %v167 = vld [vmem:[#allocation5 + $0x68] sm:$0xff]
    %v168 = vld [vmem:[#allocation5 + $0x70] sm:$0xff]
    %v169 = vld [vmem:[#allocation5 + $0x78] sm:$0xff]
    %v170 = vld [vmem:[#allocation5 + $0x80] sm:$0xff]
    %v171 = vld [vmem:[#allocation5 + $0x88] sm:$0xff]
    %v172 = vld [vmem:[#allocation5 + $0x90] sm:$0xff]
    %v173 = vld [vmem:[#allocation5 + $0x98] sm:$0xff]
    %v174 = vld [vmem:[#allocation5 + $0xa0] sm:$0xff]
    %v175 = vld [vmem:[#allocation5 + $0xa8] sm:$0xff]
    %v176 = vld [vmem:[#allocation5 + $0xb0] sm:$0xff]
    %v177 = vld [vmem:[#allocation5 + $0xb8] sm:$0xff]
    %v178 = vld [vmem:[#allocation5 + $0xc0] sm:$0xff]
    %v179 = vld [vmem:[#allocation5 + $0xc8] sm:$0xff]
    %v180 = vld [vmem:[#allocation5 + $0xd0] sm:$0xff]
    %v181 = vld [vmem:[#allocation5 + $0xd8] sm:$0xff]
    %v182 = vld [vmem:[#allocation5 + $0xe0] sm:$0xff]
    %v183 = vld [vmem:[#allocation5 + $0xe8] sm:$0xff]
    %v184 = vld [vmem:[#allocation5 + $0xf0] sm:$0xff]
    %v185 = vld [vmem:[#allocation5 + $0xf8] sm:$0xff]
    %v186 = vld [vmem:[#allocation5 + $0x100] sm:$0xff]
    %v187 = vld [vmem:[#allocation5 + $0x108] sm:$0xff]
    %v188 = vld [vmem:[#allocation5 + $0x110] sm:$0xff]
    %v189 = vld [vmem:[#allocation5 + $0x118] sm:$0xff]
    %v190 = vld [vmem:[#allocation5 + $0x120] sm:$0xff]
    %v191 = vld [vmem:[#allocation5 + $0x128] sm:$0xff]
    %v192 = vld [vmem:[#allocation5 + $0x130] sm:$0xff]
    %v193 = vld [vmem:[#allocation5 + $0x138] sm:$0xff]
    %v194 = vld [vmem:[#allocation5 + $0x140] sm:$0xff]
    %v195 = vld [vmem:[#allocation5 + $0x148] sm:$0xff]
    %v196 = vld [vmem:[#allocation5 + $0x150] sm:$0xff]
    %v197 = vld [vmem:[#allocation5 + $0x158] sm:$0xff]
    %v198 = vld [vmem:[#allocation5 + $0x160] sm:$0xff]
    %v199 = vld [vmem:[#allocation5 + $0x168] sm:$0xff]
    %v200 = vld [vmem:[#allocation5 + $0x170] sm:$0xff]
    %v201 = vld [vmem:[#allocation5 + $0x178] sm:$0xff]
    %v202 = vld [vmem:[#allocation5 + $0x180] sm:$0xff]
    %v203 = vld [vmem:[#allocation5 + $0x188] sm:$0xff]
    %205 = vset.pattern.permute.xlu0 0
    %206 = vperm.xlu0 %205, %v154
    %v207 = vpop.permute.xlu0 %206
    %210 = vset.pattern.permute.xlu0 0
    %211 = vperm.xlu0 %210, %v155
    %v212 = vpop.permute.xlu0 %211
    %215 = vset.pattern.permute.xlu0 0
    %216 = vperm.xlu0 %215, %v156
    %v217 = vpop.permute.xlu0 %216
    %220 = vset.pattern.permute.xlu0 0
    %221 = vperm.xlu0 %220, %v157
    %v222 = vpop.permute.xlu0 %221
    %225 = vset.pattern.permute.xlu0 0
    %226 = vperm.xlu0 %225, %v158
    %v227 = vpop.permute.xlu0 %226
    %230 = vset.pattern.permute.xlu0 0
    %231 = vperm.xlu0 %230, %v159
    %v232 = vpop.permute.xlu0 %231
    %235 = vset.pattern.permute.xlu0 0
    %236 = vperm.xlu0 %235, %v160
    %v237 = vpop.permute.xlu0 %236
    %240 = vset.pattern.permute.xlu0 0
    %241 = vperm.xlu0 %240, %v161
    %v242 = vpop.permute.xlu0 %241
    %245 = vset.pattern.permute.xlu0 0
    %246 = vperm.xlu0 %245, %v162
    %v247 = vpop.permute.xlu0 %246
    %250 = vset.pattern.permute.xlu0 0
    %251 = vperm.xlu0 %250, %v163
    %v252 = vpop.permute.xlu0 %251
    %255 = vset.pattern.permute.xlu0 0
    %256 = vperm.xlu0 %255, %v164
    %v257 = vpop.permute.xlu0 %256
    %260 = vset.pattern.permute.xlu0 0
    %261 = vperm.xlu0 %260, %v165
    %v262 = vpop.permute.xlu0 %261
    %265 = vset.pattern.permute.xlu0 0
    %266 = vperm.xlu0 %265, %v166
    %v267 = vpop.permute.xlu0 %266
    %270 = vset.pattern.permute.xlu0 0
    %271 = vperm.xlu0 %270, %v167
    %v272 = vpop.permute.xlu0 %271
    %275 = vset.pattern.permute.xlu0 0
    %276 = vperm.xlu0 %275, %v168
    %v277 = vpop.permute.xlu0 %276
    %280 = vset.pattern.permute.xlu0 0
    %281 = vperm.xlu0 %280, %v169
    %v282 = vpop.permute.xlu0 %281
    %285 = vset.pattern.permute.xlu0 0
    %286 = vperm.xlu0 %285, %v170
    %v287 = vpop.permute.xlu0 %286
    %290 = vset.pattern.permute.xlu0 0
    %291 = vperm.xlu0 %290, %v171
    %v292 = vpop.permute.xlu0 %291
    %295 = vset.pattern.permute.xlu0 0
    %296 = vperm.xlu0 %295, %v172
    %v297 = vpop.permute.xlu0 %296
    %300 = vset.pattern.permute.xlu0 0
    %301 = vperm.xlu0 %300, %v173
    %v302 = vpop.permute.xlu0 %301
    %305 = vset.pattern.permute.xlu0 0
    %306 = vperm.xlu0 %305, %v174
    %v307 = vpop.permute.xlu0 %306
    %310 = vset.pattern.permute.xlu0 0
    %311 = vperm.xlu0 %310, %v175
    %v312 = vpop.permute.xlu0 %311
    %315 = vset.pattern.permute.xlu0 0
    %316 = vperm.xlu0 %315, %v176
    %v317 = vpop.permute.xlu0 %316
    %320 = vset.pattern.permute.xlu0 0
    %321 = vperm.xlu0 %320, %v177
    %v322 = vpop.permute.xlu0 %321
    %325 = vset.pattern.permute.xlu0 0
    %326 = vperm.xlu0 %325, %v178
    %v327 = vpop.permute.xlu0 %326
    %330 = vset.pattern.permute.xlu0 0
    %331 = vperm.xlu0 %330, %v179
    %v332 = vpop.permute.xlu0 %331
    %335 = vset.pattern.permute.xlu0 0
    %336 = vperm.xlu0 %335, %v180
    %v337 = vpop.permute.xlu0 %336
    %340 = vset.pattern.permute.xlu0 0
    %341 = vperm.xlu0 %340, %v181
    %v342 = vpop.permute.xlu0 %341
    %345 = vset.pattern.permute.xlu0 0
    %346 = vperm.xlu0 %345, %v182
    %v347 = vpop.permute.xlu0 %346
    %350 = vset.pattern.permute.xlu0 0
    %351 = vperm.xlu0 %350, %v183
    %v352 = vpop.permute.xlu0 %351
    %355 = vset.pattern.permute.xlu0 0
    %356 = vperm.xlu0 %355, %v184
    %v357 = vpop.permute.xlu0 %356
    %360 = vset.pattern.permute.xlu0 0
    %361 = vperm.xlu0 %360, %v185
    %v362 = vpop.permute.xlu0 %361
    %365 = vset.pattern.permute.xlu0 0
    %366 = vperm.xlu0 %365, %v186
    %v367 = vpop.permute.xlu0 %366
    %370 = vset.pattern.permute.xlu0 0
    %371 = vperm.xlu0 %370, %v187
    %v372 = vpop.permute.xlu0 %371
    %375 = vset.pattern.permute.xlu0 0
    %376 = vperm.xlu0 %375, %v188
    %v377 = vpop.permute.xlu0 %376
    %380 = vset.pattern.permute.xlu0 0
    %381 = vperm.xlu0 %380, %v189
    %v382 = vpop.permute.xlu0 %381
    %385 = vset.pattern.permute.xlu0 0
    %386 = vperm.xlu0 %385, %v190
    %v387 = vpop.permute.xlu0 %386
    %390 = vset.pattern.permute.xlu0 0
    %391 = vperm.xlu0 %390, %v191
    %v392 = vpop.permute.xlu0 %391
    %395 = vset.pattern.permute.xlu0 0
    %396 = vperm.xlu0 %395, %v192
    %v397 = vpop.permute.xlu0 %396
    %400 = vset.pattern.permute.xlu0 0
    %401 = vperm.xlu0 %400, %v193
    %v402 = vpop.permute.xlu0 %401
    %405 = vset.pattern.permute.xlu0 0
    %406 = vperm.xlu0 %405, %v194
    %v407 = vpop.permute.xlu0 %406
    %410 = vset.pattern.permute.xlu0 0
    %411 = vperm.xlu0 %410, %v195
    %v412 = vpop.permute.xlu0 %411
    %415 = vset.pattern.permute.xlu0 0
    %416 = vperm.xlu0 %415, %v196
    %v417 = vpop.permute.xlu0 %416
    %420 = vset.pattern.permute.xlu0 0
    %421 = vperm.xlu0 %420, %v197
    %v422 = vpop.permute.xlu0 %421
    %425 = vset.pattern.permute.xlu0 0
    %426 = vperm.xlu0 %425, %v198
    %v427 = vpop.permute.xlu0 %426
    %430 = vset.pattern.permute.xlu0 0
    %431 = vperm.xlu0 %430, %v199
    %v432 = vpop.permute.xlu0 %431
    %435 = vset.pattern.permute.xlu0 0
    %436 = vperm.xlu0 %435, %v200
    %v437 = vpop.permute.xlu0 %436
    %440 = vset.pattern.permute.xlu0 0
    %441 = vperm.xlu0 %440, %v201
    %v442 = vpop.permute.xlu0 %441
    %445 = vset.pattern.permute.xlu0 0
    %446 = vperm.xlu0 %445, %v202
    %v447 = vpop.permute.xlu0 %446
    %450 = vset.pattern.permute.xlu0 0
    %451 = vperm.xlu0 %450, %v203
    %v452 = vpop.permute.xlu0 %451
    %v504 = vunpack.c.l.b16 %v103
    %v505 = vunpack.c.l.b16 %v104
    %v506 = vunpack.c.l.b16 %v105
    %v507 = vunpack.c.l.b16 %v106
    %v508 = vunpack.c.l.b16 %v107
    %v509 = vunpack.c.l.b16 %v108
    %v510 = vunpack.c.l.b16 %v109
    %v511 = vunpack.c.l.b16 %v110
    %v512 = vunpack.c.l.b16 %v111
    %v513 = vunpack.c.l.b16 %v112
    %v514 = vunpack.c.l.b16 %v113
    %v515 = vunpack.c.l.b16 %v114
    %v516 = vunpack.c.l.b16 %v115
    %v517 = vunpack.c.l.b16 %v116
    %v518 = vunpack.c.l.b16 %v117
    %v519 = vunpack.c.l.b16 %v118
    %v520 = vunpack.c.l.b16 %v119
    %v521 = vunpack.c.l.b16 %v120
    %v522 = vunpack.c.l.b16 %v121
    %v523 = vunpack.c.l.b16 %v122
    %v524 = vunpack.c.l.b16 %v123
    %v525 = vunpack.c.l.b16 %v124
    %v526 = vunpack.c.l.b16 %v125
    %v527 = vunpack.c.l.b16 %v126
    %v528 = vunpack.c.l.b16 %v127
    %v529 = vunpack.c.l.b16 %v128
    %v530 = vunpack.c.l.b16 %v129
    %v531 = vunpack.c.l.b16 %v130
    %v532 = vunpack.c.l.b16 %v131
    %v533 = vunpack.c.l.b16 %v132
    %v534 = vunpack.c.l.b16 %v133
    %v535 = vunpack.c.l.b16 %v134
    %v536 = vunpack.c.l.b16 %v135
    %v537 = vunpack.c.l.b16 %v136
    %v538 = vunpack.c.l.b16 %v137
    %v539 = vunpack.c.l.b16 %v138
    %v540 = vunpack.c.l.b16 %v139
    %v541 = vunpack.c.l.b16 %v140
    %v542 = vunpack.c.l.b16 %v141
    %v543 = vunpack.c.l.b16 %v142
    %v544 = vunpack.c.l.b16 %v143
    %v545 = vunpack.c.l.b16 %v144
    %v546 = vunpack.c.l.b16 %v145
    %v547 = vunpack.c.l.b16 %v146
    %v548 = vunpack.c.l.b16 %v147
    %v549 = vunpack.c.l.b16 %v148
    %v550 = vunpack.c.l.b16 %v149
    %v551 = vunpack.c.l.b16 %v150
    %v552 = vunpack.c.l.b16 %v151
    %v553 = vunpack.c.l.b16 %v152
    %v554 = vpack.c.b16 %v505, %v504
    %v555 = vpack.c.b16 %v507, %v506
    %v556 = vpack.c.b16 %v509, %v508
    %v557 = vpack.c.b16 %v511, %v510
    %v558 = vpack.c.b16 %v513, %v512
    %v559 = vpack.c.b16 %v515, %v514
    %v560 = vpack.c.b16 %v517, %v516
    %v561 = vpack.c.b16 %v519, %v518
    %v562 = vpack.c.b16 %v521, %v520
    %v563 = vpack.c.b16 %v523, %v522
    %v564 = vpack.c.b16 %v525, %v524
    %v565 = vpack.c.b16 %v527, %v526
    %v566 = vpack.c.b16 %v529, %v528
    %v567 = vpack.c.b16 %v531, %v530
    %v568 = vpack.c.b16 %v533, %v532
    %v569 = vpack.c.b16 %v535, %v534
    %v570 = vpack.c.b16 %v537, %v536
    %v571 = vpack.c.b16 %v539, %v538
    %v572 = vpack.c.b16 %v541, %v540
    %v573 = vpack.c.b16 %v543, %v542
    %v574 = vpack.c.b16 %v545, %v544
    %v575 = vpack.c.b16 %v547, %v546
    %v576 = vpack.c.b16 %v549, %v548
    %v577 = vpack.c.b16 %v551, %v550
    %v578 = vpack.c.b16 %v553, %v552
    %vm579 = vcmask 64512
    %v581 = vsel %vm579, %v554, 0
    %v584 = vsel %vm579, %v555, 0
    %v587 = vsel %vm579, %v556, 0
    %v590 = vsel %vm579, %v557, 0
    %v593 = vsel %vm579, %v558, 0
    %v596 = vsel %vm579, %v559, 0
    %v599 = vsel %vm579, %v560, 0
    %v602 = vsel %vm579, %v561, 0
    %v605 = vsel %vm579, %v562, 0
    %v608 = vsel %vm579, %v563, 0
    %v611 = vsel %vm579, %v564, 0
    %v614 = vsel %vm579, %v565, 0
    %v617 = vsel %vm579, %v566, 0
    %v620 = vsel %vm579, %v567, 0
    %v623 = vsel %vm579, %v568, 0
    %v626 = vsel %vm579, %v569, 0
    %v629 = vsel %vm579, %v570, 0
    %v632 = vsel %vm579, %v571, 0
    %v635 = vsel %vm579, %v572, 0
    %v638 = vsel %vm579, %v573, 0
    %v641 = vsel %vm579, %v574, 0
    %v644 = vsel %vm579, %v575, 0
    %v647 = vsel %vm579, %v576, 0
    %v650 = vsel %vm579, %v577, 0
    %v653 = vsel %vm579, %v578, 0
    %vm655 = vcmask 1043456
    %v657 = vsel %vm655, %v153, 0
    %659 = vmatprep.subr.bf16.mxu0 0
    %660 = vmatpush1.bf16.msra.mxu0 %v657
    %661 = vmatprep.subr.bf16.mxu0 0
    %662 = vmatpush1.bf16.msra.mxu0 0
    %663 = vmatprep.subr.bf16.mxu0 0
    %664 = vmatpush1.bf16.msra.mxu0 0
    %665 = vmatprep.subr.bf16.mxu0 0
    %666 = vmatpush1.bf16.msra.mxu0 0
    %667 = vmatprep.subr.bf16.mxu0 0
    %668 = vmatpush1.bf16.msra.mxu0 0
    %669 = vmatprep.subr.bf16.mxu0 0
    %670 = vmatpush1.bf16.msra.mxu0 0
    %671 = vmatprep.subr.bf16.mxu0 0
    %672 = vmatpush1.bf16.msra.mxu0 0
    %673 = vmatprep.subr.bf16.mxu0 0
    %674 = vmatpush1.bf16.msra.mxu0 0
    %675 = vmatprep.subr.bf16.mxu0 0
    %676 = vmatpush1.bf16.msra.mxu0 0
    %677 = vmatprep.subr.bf16.mxu0 0
    %678 = vmatpush1.bf16.msra.mxu0 0
    %679 = vmatprep.subr.bf16.mxu0 0
    %680 = vmatpush1.bf16.msra.mxu0 0
    %681 = vmatprep.subr.bf16.mxu0 0
    %682 = vmatpush1.bf16.msra.mxu0 0
    %683 = vmatprep.subr.bf16.mxu0 0
    %684 = vmatpush1.bf16.msra.mxu0 0
    %685 = vmatprep.subr.bf16.mxu0 0
    %686 = vmatpush1.bf16.msra.mxu0 0
    %687 = vmatprep.subr.bf16.mxu0 0
    %688 = vmatpush1.bf16.msra.mxu0 0
    %689 = vmatprep.subr.bf16.mxu0 0
    %690 = vmatpush1.bf16.msra.mxu0 0
    %691 = vmatprep.mubr.bf16.mxu0 0
    %692 = vmatmul.mubr.bf16.gmra.mrb[0].mxu0 %v581
    %v693 = vpop.f32.mrb[0].mxu0
    %v694 = vadd.f32 %v207, %v693
    %v695 = vpop.f32.mrb[0].mxu0
    %v696 = vpop.f32.mrb[0].mxu0
    %v697 = vadd.f32 %v212, %v696
    %v698 = vpop.f32.mrb[0].mxu0
    %699 = vmatprep.mubr.bf16.mxu0 0
    %700 = vmatmul.mubr.bf16.gmra.mrb[0].mxu0 %v584
    %v701 = vpop.f32.mrb[0].mxu0
    %v702 = vadd.f32 %v217, %v701
    %v703 = vpop.f32.mrb[0].mxu0
    %v704 = vpop.f32.mrb[0].mxu0
    %v705 = vadd.f32 %v222, %v704
    %v706 = vpop.f32.mrb[0].mxu0
    %707 = vmatprep.mubr.bf16.mxu0 0
    %708 = vmatmul.mubr.bf16.gmra.mrb[0].mxu0 %v587
    %v709 = vpop.f32.mrb[0].mxu0
    %v710 = vadd.f32 %v227, %v709
    %v711 = vpop.f32.mrb[0].mxu0
    %v712 = vpop.f32.mrb[0].mxu0
    %v713 = vadd.f32 %v232, %v712
    %v714 = vpop.f32.mrb[0].mxu0
    %715 = vmatprep.mubr.bf16.mxu0 0
    %716 = vmatmul.mubr.bf16.gmra.mrb[0].mxu0 %v590
    %v717 = vpop.f32.mrb[0].mxu0
    %v718 = vadd.f32 %v237, %v717
    %v719 = vpop.f32.mrb[0].mxu0
    %v720 = vpop.f32.mrb[0].mxu0
    %v721 = vadd.f32 %v242, %v720
    %v722 = vpop.f32.mrb[0].mxu0
    %723 = vmatprep.mubr.bf16.mxu0 0
    %724 = vmatmul.mubr.bf16.gmra.mrb[0].mxu0 %v593
    %v725 = vpop.f32.mrb[0].mxu0
    %v726 = vadd.f32 %v247, %v725
    %v727 = vpop.f32.mrb[0].mxu0
    %v728 = vpop.f32.mrb[0].mxu0
    %v729 = vadd.f32 %v252, %v728
    %v730 = vpop.f32.mrb[0].mxu0
    %731 = vmatprep.mubr.bf16.mxu0 0
    %732 = vmatmul.mubr.bf16.gmra.mrb[0].mxu0 %v596
    %v733 = vpop.f32.mrb[0].mxu0
    %v734 = vadd.f32 %v257, %v733
    %v735 = vpop.f32.mrb[0].mxu0
    %v736 = vpop.f32.mrb[0].mxu0
    %v737 = vadd.f32 %v262, %v736
    %v738 = vpop.f32.mrb[0].mxu0
    %739 = vmatprep.mubr.bf16.mxu0 0
    %740 = vmatmul.mubr.bf16.gmra.mrb[0].mxu0 %v599
    %v741 = vpop.f32.mrb[0].mxu0
    %v742 = vadd.f32 %v267, %v741
    %v743 = vpop.f32.mrb[0].mxu0
    %v744 = vpop.f32.mrb[0].mxu0
    %v745 = vadd.f32 %v272, %v744
    %v746 = vpop.f32.mrb[0].mxu0
    %747 = vmatprep.mubr.bf16.mxu0 0
    %748 = vmatmul.mubr.bf16.gmra.mrb[0].mxu0 %v602
    %v749 = vpop.f32.mrb[0].mxu0
    %v750 = vadd.f32 %v277, %v749
    %v751 = vpop.f32.mrb[0].mxu0
    %v752 = vpop.f32.mrb[0].mxu0
    %v753 = vadd.f32 %v282, %v752
    %v754 = vpop.f32.mrb[0].mxu0
    %755 = vmatprep.mubr.bf16.mxu0 0
    %756 = vmatmul.mubr.bf16.gmra.mrb[0].mxu0 %v605
    %v757 = vpop.f32.mrb[0].mxu0
    %v758 = vadd.f32 %v287, %v757
    %v759 = vpop.f32.mrb[0].mxu0
    %v760 = vpop.f32.mrb[0].mxu0
    %v761 = vadd.f32 %v292, %v760
    %v762 = vpop.f32.mrb[0].mxu0
    %763 = vmatprep.mubr.bf16.mxu0 0
    %764 = vmatmul.mubr.bf16.gmra.mrb[0].mxu0 %v608
    %v765 = vpop.f32.mrb[0].mxu0
    %v766 = vadd.f32 %v297, %v765
    %v767 = vpop.f32.mrb[0].mxu0
    %v768 = vpop.f32.mrb[0].mxu0
    %v769 = vadd.f32 %v302, %v768
    %v770 = vpop.f32.mrb[0].mxu0
    %771 = vmatprep.mubr.bf16.mxu0 0
    %772 = vmatmul.mubr.bf16.gmra.mrb[0].mxu0 %v611
    %v773 = vpop.f32.mrb[0].mxu0
    %v774 = vadd.f32 %v307, %v773
    %v775 = vpop.f32.mrb[0].mxu0
    %v776 = vpop.f32.mrb[0].mxu0
    %v777 = vadd.f32 %v312, %v776
    %v778 = vpop.f32.mrb[0].mxu0
    %779 = vmatprep.mubr.bf16.mxu0 0
    %780 = vmatmul.mubr.bf16.gmra.mrb[0].mxu0 %v614
    %v781 = vpop.f32.mrb[0].mxu0
    %v782 = vadd.f32 %v317, %v781
    %v783 = vpop.f32.mrb[0].mxu0
    %v784 = vpop.f32.mrb[0].mxu0
    %v785 = vadd.f32 %v322, %v784
    %v786 = vpop.f32.mrb[0].mxu0
    %787 = vmatprep.mubr.bf16.mxu0 0
    %788 = vmatmul.mubr.bf16.gmra.mrb[0].mxu0 %v617
    %v789 = vpop.f32.mrb[0].mxu0
    %v790 = vadd.f32 %v327, %v789
    %v791 = vpop.f32.mrb[0].mxu0
    %v792 = vpop.f32.mrb[0].mxu0
    %v793 = vadd.f32 %v332, %v792
    %v794 = vpop.f32.mrb[0].mxu0
    %795 = vmatprep.mubr.bf16.mxu0 0
    %796 = vmatmul.mubr.bf16.gmra.mrb[0].mxu0 %v620
    %v797 = vpop.f32.mrb[0].mxu0
    %v798 = vadd.f32 %v337, %v797
    %v799 = vpop.f32.mrb[0].mxu0
    %v800 = vpop.f32.mrb[0].mxu0
    %v801 = vadd.f32 %v342, %v800
    %v802 = vpop.f32.mrb[0].mxu0
    %803 = vmatprep.mubr.bf16.mxu0 0
    %804 = vmatmul.mubr.bf16.gmra.mrb[0].mxu0 %v623
    %v805 = vpop.f32.mrb[0].mxu0
    %v806 = vadd.f32 %v347, %v805
    %v807 = vpop.f32.mrb[0].mxu0
    %v808 = vpop.f32.mrb[0].mxu0
    %v809 = vadd.f32 %v352, %v808
    %v810 = vpop.f32.mrb[0].mxu0
    %811 = vmatprep.mubr.bf16.mxu0 0
    %812 = vmatmul.mubr.bf16.gmra.mrb[0].mxu0 %v626
    %v813 = vpop.f32.mrb[0].mxu0
    %v814 = vadd.f32 %v357, %v813
    %v815 = vpop.f32.mrb[0].mxu0
    %v816 = vpop.f32.mrb[0].mxu0
    %v817 = vadd.f32 %v362, %v816
    %v818 = vpop.f32.mrb[0].mxu0
    %819 = vmatprep.mubr.bf16.mxu0 0
    %820 = vmatmul.mubr.bf16.gmra.mrb[0].mxu0 %v629
    %v821 = vpop.f32.mrb[0].mxu0
    %v822 = vadd.f32 %v367, %v821
    %v823 = vpop.f32.mrb[0].mxu0
    %v824 = vpop.f32.mrb[0].mxu0
    %v825 = vadd.f32 %v372, %v824
    %v826 = vpop.f32.mrb[0].mxu0
    %827 = vmatprep.mubr.bf16.mxu0 0
    %828 = vmatmul.mubr.bf16.gmra.mrb[0].mxu0 %v632
    %v829 = vpop.f32.mrb[0].mxu0
    %v830 = vadd.f32 %v377, %v829
    %v831 = vpop.f32.mrb[0].mxu0
    %v832 = vpop.f32.mrb[0].mxu0
    %v833 = vadd.f32 %v382, %v832
    %v834 = vpop.f32.mrb[0].mxu0
    %835 = vmatprep.mubr.bf16.mxu0 0
    %836 = vmatmul.mubr.bf16.gmra.mrb[0].mxu0 %v635
    %v837 = vpop.f32.mrb[0].mxu0
    %v838 = vadd.f32 %v387, %v837
    %v839 = vpop.f32.mrb[0].mxu0
    %v840 = vpop.f32.mrb[0].mxu0
    %v841 = vadd.f32 %v392, %v840
    %v842 = vpop.f32.mrb[0].mxu0
    %843 = vmatprep.mubr.bf16.mxu0 0
    %844 = vmatmul.mubr.bf16.gmra.mrb[0].mxu0 %v638
    %v845 = vpop.f32.mrb[0].mxu0
    %v846 = vadd.f32 %v397, %v845
    %v847 = vpop.f32.mrb[0].mxu0
    %v848 = vpop.f32.mrb[0].mxu0
    %v849 = vadd.f32 %v402, %v848
    %v850 = vpop.f32.mrb[0].mxu0
    %851 = vmatprep.mubr.bf16.mxu0 0
    %852 = vmatmul.mubr.bf16.gmra.mrb[0].mxu0 %v641
    %v853 = vpop.f32.mrb[0].mxu0
    %v854 = vadd.f32 %v407, %v853
    %v855 = vpop.f32.mrb[0].mxu0
    %v856 = vpop.f32.mrb[0].mxu0
    %v857 = vadd.f32 %v412, %v856
    %v858 = vpop.f32.mrb[0].mxu0
    %859 = vmatprep.mubr.bf16.mxu0 0
    %860 = vmatmul.mubr.bf16.gmra.mrb[0].mxu0 %v644
    %v861 = vpop.f32.mrb[0].mxu0
    %v862 = vadd.f32 %v417, %v861
    %v863 = vpop.f32.mrb[0].mxu0
    %v864 = vpop.f32.mrb[0].mxu0
    %v865 = vadd.f32 %v422, %v864
    %v866 = vpop.f32.mrb[0].mxu0
    %867 = vmatprep.mubr.bf16.mxu0 0
    %868 = vmatmul.mubr.bf16.gmra.mrb[0].mxu0 %v647
    %v869 = vpop.f32.mrb[0].mxu0
    %v870 = vadd.f32 %v427, %v869
    %v871 = vpop.f32.mrb[0].mxu0
    %v872 = vpop.f32.mrb[0].mxu0
    %v873 = vadd.f32 %v432, %v872
    %v874 = vpop.f32.mrb[0].mxu0
    %875 = vmatprep.mubr.bf16.mxu0 0
    %876 = vmatmul.mubr.bf16.gmra.mrb[0].mxu0 %v650
    %v877 = vpop.f32.mrb[0].mxu0
    %v878 = vadd.f32 %v437, %v877
    %v879 = vpop.f32.mrb[0].mxu0
    %v880 = vpop.f32.mrb[0].mxu0
    %v881 = vadd.f32 %v442, %v880
    %v882 = vpop.f32.mrb[0].mxu0
    %883 = vmatprep.mubr.bf16.mxu0 0
    %884 = vmatmul.mubr.bf16.gmra.mrb[0].mxu0 %v653
    %v885 = vpop.f32.mrb[0].mxu0
    %v886 = vadd.f32 %v447, %v885
    %v887 = vpop.f32.mrb[0].mxu0
    %v888 = vpop.f32.mrb[0].mxu0
    %v889 = vadd.f32 %v452, %v888
    %v890 = vpop.f32.mrb[0].mxu0
    %891 = vdwg.mxu0
    %v892 = vmax.f32 %v694, 0.0
    %v893 = vmax.f32 %v697, 0.0
    %v894 = vmax.f32 %v702, 0.0
    %v895 = vmax.f32 %v705, 0.0
    %v896 = vmax.f32 %v710, 0.0
    %v897 = vmax.f32 %v713, 0.0
    %v898 = vmax.f32 %v718, 0.0
    %v899 = vmax.f32 %v721, 0.0
    %v900 = vmax.f32 %v726, 0.0
    %v901 = vmax.f32 %v729, 0.0
    %v902 = vmax.f32 %v734, 0.0
    %v903 = vmax.f32 %v737, 0.0
    %v904 = vmax.f32 %v742, 0.0
    %v905 = vmax.f32 %v745, 0.0
    %v906 = vmax.f32 %v750, 0.0
    %v907 = vmax.f32 %v753, 0.0
    %v908 = vmax.f32 %v758, 0.0
    %v909 = vmax.f32 %v761, 0.0
    %v910 = vmax.f32 %v766, 0.0
    %v911 = vmax.f32 %v769, 0.0
    %v912 = vmax.f32 %v774, 0.0
    %v913 = vmax.f32 %v777, 0.0
    %v914 = vmax.f32 %v782, 0.0
    %v915 = vmax.f32 %v785, 0.0
    %v916 = vmax.f32 %v790, 0.0
    %v917 = vmax.f32 %v793, 0.0
    %v918 = vmax.f32 %v798, 0.0
    %v919 = vmax.f32 %v801, 0.0
    %v920 = vmax.f32 %v806, 0.0
    %v921 = vmax.f32 %v809, 0.0
    %v922 = vmax.f32 %v814, 0.0
    %v923 = vmax.f32 %v817, 0.0
    %v924 = vmax.f32 %v822, 0.0
    %v925 = vmax.f32 %v825, 0.0
    %v926 = vmax.f32 %v830, 0.0
    %v927 = vmax.f32 %v833, 0.0
    %v928 = vmax.f32 %v838, 0.0
    %v929 = vmax.f32 %v841, 0.0
    %v930 = vmax.f32 %v846, 0.0
    %v931 = vmax.f32 %v849, 0.0
    %v932 = vmax.f32 %v854, 0.0
    %v933 = vmax.f32 %v857, 0.0
    %v934 = vmax.f32 %v862, 0.0
    %v935 = vmax.f32 %v865, 0.0
    %v936 = vmax.f32 %v870, 0.0
    %v937 = vmax.f32 %v873, 0.0
    %v938 = vmax.f32 %v878, 0.0
    %v939 = vmax.f32 %v881, 0.0
    %v940 = vmax.f32 %v886, 0.0
    %v941 = vmax.f32 %v889, 0.0
    %v942 = vld [vmem:[#allocation7] sm:$0xff]
    %v943 = vld [vmem:[#allocation7 + $0x8] sm:$0xff]
    %v944 = vld [vmem:[#allocation7 + $0x10] sm:$0xff]
    %v945 = vld [vmem:[#allocation7 + $0x18] sm:$0xff]
    %v946 = vld [vmem:[#allocation7 + $0x20] sm:$0xff]
    %v947 = vld [vmem:[#allocation7 + $0x28] sm:$0xff]
    %v948 = vld [vmem:[#allocation7 + $0x30] sm:$0xff]
    %v949 = vld [vmem:[#allocation7 + $0x38] sm:$0xff]
    %v950 = vld [vmem:[#allocation7 + $0x40] sm:$0xff]
    %v951 = vld [vmem:[#allocation7 + $0x48] sm:$0xff]
    %v952 = vld [vmem:[#allocation7 + $0x50] sm:$0xff]
    %v953 = vld [vmem:[#allocation7 + $0x58] sm:$0xff]
    %v954 = vld [vmem:[#allocation7 + $0x60] sm:$0xff]
    %v955 = vld [vmem:[#allocation7 + $0x68] sm:$0xff]
    %v956 = vld [vmem:[#allocation7 + $0x70] sm:$0xff]
    %v957 = vld [vmem:[#allocation7 + $0x78] sm:$0xff]
    %v958 = vld [vmem:[#allocation7 + $0x80] sm:$0xff]
    %v959 = vld [vmem:[#allocation7 + $0x88] sm:$0xff]
    %v960 = vld [vmem:[#allocation7 + $0x90] sm:$0xff]
    %v961 = vld [vmem:[#allocation7 + $0x98] sm:$0xff]
    %v962 = vld [vmem:[#allocation7 + $0xa0] sm:$0xff]
    %v963 = vld [vmem:[#allocation7 + $0xa8] sm:$0xff]
    %v964 = vld [vmem:[#allocation7 + $0xb0] sm:$0xff]
    %v965 = vld [vmem:[#allocation7 + $0xb8] sm:$0xff]
    %v966 = vld [vmem:[#allocation7 + $0xc0] sm:$0xff]
    %v967 = vld [vmem:[#allocation7 + $0xc8] sm:$0xff]
    %v968 = vld [vmem:[#allocation7 + $0xd0] sm:$0xff]
    %v969 = vld [vmem:[#allocation7 + $0xd8] sm:$0xff]
    %v970 = vld [vmem:[#allocation7 + $0xe0] sm:$0xff]
    %v971 = vld [vmem:[#allocation7 + $0xe8] sm:$0xff]
    %v972 = vld [vmem:[#allocation7 + $0xf0] sm:$0xff]
    %v973 = vld [vmem:[#allocation7 + $0xf8] sm:$0xff]
    %v974 = vld [vmem:[#allocation7 + $0x100] sm:$0xff]
    %v975 = vld [vmem:[#allocation7 + $0x108] sm:$0xff]
    %v976 = vld [vmem:[#allocation7 + $0x110] sm:$0xff]
    %v977 = vld [vmem:[#allocation7 + $0x118] sm:$0xff]
    %v978 = vld [vmem:[#allocation7 + $0x120] sm:$0xff]
    %v979 = vld [vmem:[#allocation7 + $0x128] sm:$0xff]
    %v980 = vld [vmem:[#allocation7 + $0x130] sm:$0xff]
    %v981 = vld [vmem:[#allocation7 + $0x138] sm:$0xff]
    %v982 = vld [vmem:[#allocation7 + $0x140] sm:$0xff]
    %v983 = vld [vmem:[#allocation7 + $0x148] sm:$0xff]
    %v984 = vld [vmem:[#allocation7 + $0x150] sm:$0xff]
    %v985 = vld [vmem:[#allocation7 + $0x158] sm:$0xff]
    %v986 = vld [vmem:[#allocation7 + $0x160] sm:$0xff]
    %v987 = vld [vmem:[#allocation7 + $0x168] sm:$0xff]
    %v988 = vld [vmem:[#allocation7 + $0x170] sm:$0xff]
    %v989 = vld [vmem:[#allocation7 + $0x178] sm:$0xff]
    %v990 = vld [vmem:[#allocation7 + $0x180] sm:$0xff]
    %v991 = vld [vmem:[#allocation7 + $0x188] sm:$0xff]
    %v992 = vld [vmem:[#allocation7 + $0x190] sm:$0xff]
    %v993 = vld [vmem:[#allocation7 + $0x198] sm:$0xff]
    %v994 = vld [vmem:[#allocation7 + $0x1a0] sm:$0xff]
    %v995 = vld [vmem:[#allocation7 + $0x1a8] sm:$0xff]
    %v996 = vld [vmem:[#allocation7 + $0x1b0] sm:$0xff]
    %v997 = vld [vmem:[#allocation7 + $0x1b8] sm:$0xff]
    %v998 = vld [vmem:[#allocation7 + $0x1c0] sm:$0xff]
    %v999 = vld [vmem:[#allocation7 + $0x1c8] sm:$0xff]
    %v1000 = vld [vmem:[#allocation7 + $0x1d0] sm:$0xff]
    %v1001 = vld [vmem:[#allocation7 + $0x1d8] sm:$0xff]
    %v1002 = vld [vmem:[#allocation7 + $0x1e0] sm:$0xff]
    %v1003 = vld [vmem:[#allocation7 + $0x1e8] sm:$0xff]
    %v1004 = vld [vmem:[#allocation7 + $0x1f0] sm:$0xff]
    %v1005 = vld [vmem:[#allocation7 + $0x1f8] sm:$0xff]
    %v1006 = vld [vmem:[#allocation7 + $0x200] sm:$0xff]
    %v1007 = vld [vmem:[#allocation7 + $0x208] sm:$0xff]
    %v1008 = vld [vmem:[#allocation7 + $0x210] sm:$0xff]
    %v1009 = vld [vmem:[#allocation7 + $0x218] sm:$0xff]
    %v1010 = vld [vmem:[#allocation7 + $0x220] sm:$0xff]
    %v1011 = vld [vmem:[#allocation7 + $0x228] sm:$0xff]
    %v1012 = vld [vmem:[#allocation7 + $0x230] sm:$0xff]
    %v1013 = vld [vmem:[#allocation7 + $0x238] sm:$0xff]
    %v1014 = vld [vmem:[#allocation7 + $0x240] sm:$0xff]
    %v1015 = vld [vmem:[#allocation7 + $0x248] sm:$0xff]
    %v1016 = vld [vmem:[#allocation7 + $0x250] sm:$0x33]
    %v1017 = vld [vmem:[#allocation7 + $0x258] sm:$0x33]
    %v1018 = vpack.c.bf16 %v893, %v892
    %v1019 = vpack.c.bf16 %v895, %v894
    %v1020 = vpack.c.bf16 %v897, %v896
    %v1021 = vpack.c.bf16 %v899, %v898
    %v1022 = vpack.c.bf16 %v901, %v900
    %v1023 = vpack.c.bf16 %v903, %v902
    %v1024 = vpack.c.bf16 %v905, %v904
    %v1025 = vpack.c.bf16 %v907, %v906
    %v1026 = vpack.c.bf16 %v909, %v908
    %v1027 = vpack.c.bf16 %v911, %v910
    %v1028 = vpack.c.bf16 %v913, %v912
    %v1029 = vpack.c.bf16 %v915, %v914
    %v1030 = vpack.c.bf16 %v917, %v916
    %v1031 = vpack.c.bf16 %v919, %v918
    %v1032 = vpack.c.bf16 %v921, %v920
    %v1033 = vpack.c.bf16 %v923, %v922
    %v1034 = vpack.c.bf16 %v925, %v924
    %v1035 = vpack.c.bf16 %v927, %v926
    %v1036 = vpack.c.bf16 %v929, %v928
    %v1037 = vpack.c.bf16 %v931, %v930
    %v1038 = vpack.c.bf16 %v933, %v932
    %v1039 = vpack.c.bf16 %v935, %v934
    %v1040 = vpack.c.bf16 %v937, %v936
    %v1041 = vpack.c.bf16 %v939, %v938
    %v1042 = vpack.c.bf16 %v941, %v940
    %v1043 = vld [vmem:[#allocation8] sm:$0xff]
    %v1044 = vld [vmem:[#allocation8 + $0x8] sm:$0xff]
    %v1045 = vld [vmem:[#allocation8 + $0x10] sm:$0xff]
    %v1046 = vld [vmem:[#allocation8 + $0x18] sm:$0xff]
    %v1047 = vld [vmem:[#allocation8 + $0x20] sm:$0xff]
    %v1048 = vld [vmem:[#allocation8 + $0x28] sm:$0xff]
    %v1049 = vld [vmem:[#allocation8 + $0x30] sm:$0xff]
    %v1050 = vld [vmem:[#allocation8 + $0x38] sm:$0xff]
    %v1051 = vld [vmem:[#allocation8 + $0x40] sm:$0xff]
    %v1052 = vld [vmem:[#allocation8 + $0x48] sm:$0xff]
    %v1053 = vld [vmem:[#allocation8 + $0x50] sm:$0xff]
    %v1054 = vld [vmem:[#allocation8 + $0x58] sm:$0xff]
    %v1055 = vld [vmem:[#allocation8 + $0x60] sm:$0xff]
    %v1056 = vld [vmem:[#allocation8 + $0x68] sm:$0xff]
    %v1057 = vld [vmem:[#allocation8 + $0x70] sm:$0xff]
    %v1058 = vld [vmem:[#allocation8 + $0x78] sm:$0xff]
    %v1059 = vld [vmem:[#allocation8 + $0x80] sm:$0xff]
    %v1060 = vld [vmem:[#allocation8 + $0x88] sm:$0xff]
    %v1061 = vld [vmem:[#allocation8 + $0x90] sm:$0xff]
    %v1062 = vld [vmem:[#allocation8 + $0x98] sm:$0xff]
    %v1063 = vld [vmem:[#allocation8 + $0xa0] sm:$0xff]
    %v1064 = vld [vmem:[#allocation8 + $0xa8] sm:$0xff]
    %v1065 = vld [vmem:[#allocation8 + $0xb0] sm:$0xff]
    %v1066 = vld [vmem:[#allocation8 + $0xb8] sm:$0xff]
    %v1067 = vld [vmem:[#allocation8 + $0xc0] sm:$0xff]
    %v1068 = vld [vmem:[#allocation8 + $0xc8] sm:$0xff]
    %v1069 = vld [vmem:[#allocation8 + $0xd0] sm:$0xff]
    %v1070 = vld [vmem:[#allocation8 + $0xd8] sm:$0xff]
    %v1071 = vld [vmem:[#allocation8 + $0xe0] sm:$0xff]
    %v1072 = vld [vmem:[#allocation8 + $0xe8] sm:$0xff]
    %v1073 = vld [vmem:[#allocation8 + $0xf0] sm:$0xff]
    %v1074 = vld [vmem:[#allocation8 + $0xf8] sm:$0xff]
    %v1075 = vld [vmem:[#allocation8 + $0x100] sm:$0xff]
    %v1076 = vld [vmem:[#allocation8 + $0x108] sm:$0xff]
    %v1077 = vld [vmem:[#allocation8 + $0x110] sm:$0xff]
    %v1078 = vld [vmem:[#allocation8 + $0x118] sm:$0xff]
    %v1079 = vld [vmem:[#allocation8 + $0x120] sm:$0xff]
    %v1080 = vld [vmem:[#allocation8 + $0x128] sm:$0xf]
    %v1081 = vld [vmem:[%s1] sm:$0x1]
    %1083 = vset.pattern.permute.xlu0 0
    %1084 = vperm.xlu0 %1083, %v1043
    %v1085 = vpop.permute.xlu0 %1084
    %1088 = vset.pattern.permute.xlu0 0
    %1089 = vperm.xlu0 %1088, %v1044
    %v1090 = vpop.permute.xlu0 %1089
    %1093 = vset.pattern.permute.xlu0 0
    %1094 = vperm.xlu0 %1093, %v1045
    %v1095 = vpop.permute.xlu0 %1094
    %1098 = vset.pattern.permute.xlu0 0
    %1099 = vperm.xlu0 %1098, %v1046
    %v1100 = vpop.permute.xlu0 %1099
    %1103 = vset.pattern.permute.xlu0 0
    %1104 = vperm.xlu0 %1103, %v1047
    %v1105 = vpop.permute.xlu0 %1104
    %1108 = vset.pattern.permute.xlu0 0
    %1109 = vperm.xlu0 %1108, %v1048
    %v1110 = vpop.permute.xlu0 %1109
    %1113 = vset.pattern.permute.xlu0 0
    %1114 = vperm.xlu0 %1113, %v1049
    %v1115 = vpop.permute.xlu0 %1114
    %1118 = vset.pattern.permute.xlu0 0
    %1119 = vperm.xlu0 %1118, %v1050
    %v1120 = vpop.permute.xlu0 %1119
    %1123 = vset.pattern.permute.xlu0 0
    %1124 = vperm.xlu0 %1123, %v1051
    %v1125 = vpop.permute.xlu0 %1124
    %1128 = vset.pattern.permute.xlu0 0
    %1129 = vperm.xlu0 %1128, %v1052
    %v1130 = vpop.permute.xlu0 %1129
    %1133 = vset.pattern.permute.xlu0 0
    %1134 = vperm.xlu0 %1133, %v1053
    %v1135 = vpop.permute.xlu0 %1134
    %1138 = vset.pattern.permute.xlu0 0
    %1139 = vperm.xlu0 %1138, %v1054
    %v1140 = vpop.permute.xlu0 %1139
    %1143 = vset.pattern.permute.xlu0 0
    %1144 = vperm.xlu0 %1143, %v1055
    %v1145 = vpop.permute.xlu0 %1144
    %1148 = vset.pattern.permute.xlu0 0
    %1149 = vperm.xlu0 %1148, %v1056
    %v1150 = vpop.permute.xlu0 %1149
    %1153 = vset.pattern.permute.xlu0 0
    %1154 = vperm.xlu0 %1153, %v1057
    %v1155 = vpop.permute.xlu0 %1154
    %1158 = vset.pattern.permute.xlu0 0
    %1159 = vperm.xlu0 %1158, %v1058
    %v1160 = vpop.permute.xlu0 %1159
    %1163 = vset.pattern.permute.xlu0 0
    %1164 = vperm.xlu0 %1163, %v1059
    %v1165 = vpop.permute.xlu0 %1164
    %1168 = vset.pattern.permute.xlu0 0
    %1169 = vperm.xlu0 %1168, %v1060
    %v1170 = vpop.permute.xlu0 %1169
    %1173 = vset.pattern.permute.xlu0 0
    %1174 = vperm.xlu0 %1173, %v1061
    %v1175 = vpop.permute.xlu0 %1174
    %1178 = vset.pattern.permute.xlu0 0
    %1179 = vperm.xlu0 %1178, %v1062
    %v1180 = vpop.permute.xlu0 %1179
    %1183 = vset.pattern.permute.xlu0 0
    %1184 = vperm.xlu0 %1183, %v1063
    %v1185 = vpop.permute.xlu0 %1184
    %1188 = vset.pattern.permute.xlu0 0
    %1189 = vperm.xlu0 %1188, %v1064
    %v1190 = vpop.permute.xlu0 %1189
    %1193 = vset.pattern.permute.xlu0 0
    %1194 = vperm.xlu0 %1193, %v1065
    %v1195 = vpop.permute.xlu0 %1194
    %1198 = vset.pattern.permute.xlu0 0
    %1199 = vperm.xlu0 %1198, %v1066
    %v1200 = vpop.permute.xlu0 %1199
    %1203 = vset.pattern.permute.xlu0 0
    %1204 = vperm.xlu0 %1203, %v1067
    %v1205 = vpop.permute.xlu0 %1204
    %1208 = vset.pattern.permute.xlu0 0
    %1209 = vperm.xlu0 %1208, %v1068
    %v1210 = vpop.permute.xlu0 %1209
    %1213 = vset.pattern.permute.xlu0 0
    %1214 = vperm.xlu0 %1213, %v1069
    %v1215 = vpop.permute.xlu0 %1214
    %1218 = vset.pattern.permute.xlu0 0
    %1219 = vperm.xlu0 %1218, %v1070
    %v1220 = vpop.permute.xlu0 %1219
    %1223 = vset.pattern.permute.xlu0 0
    %1224 = vperm.xlu0 %1223, %v1071
    %v1225 = vpop.permute.xlu0 %1224
    %1228 = vset.pattern.permute.xlu0 0
    %1229 = vperm.xlu0 %1228, %v1072
    %v1230 = vpop.permute.xlu0 %1229
    %1233 = vset.pattern.permute.xlu0 0
    %1234 = vperm.xlu0 %1233, %v1073
    %v1235 = vpop.permute.xlu0 %1234
    %1238 = vset.pattern.permute.xlu0 0
    %1239 = vperm.xlu0 %1238, %v1074
    %v1240 = vpop.permute.xlu0 %1239
    %1243 = vset.pattern.permute.xlu0 0
    %1244 = vperm.xlu0 %1243, %v1075
    %v1245 = vpop.permute.xlu0 %1244
    %1248 = vset.pattern.permute.xlu0 0
    %1249 = vperm.xlu0 %1248, %v1076
    %v1250 = vpop.permute.xlu0 %1249
    %1253 = vset.pattern.permute.xlu0 0
    %1254 = vperm.xlu0 %1253, %v1077
    %v1255 = vpop.permute.xlu0 %1254
    %1258 = vset.pattern.permute.xlu0 0
    %1259 = vperm.xlu0 %1258, %v1078
    %v1260 = vpop.permute.xlu0 %1259
    %1263 = vset.pattern.permute.xlu0 0
    %1264 = vperm.xlu0 %1263, %v1079
    %v1265 = vpop.permute.xlu0 %1264
    %1268 = vset.pattern.permute.xlu0 0
    %1269 = vperm.xlu0 %1268, %v1080
    %v1270 = vpop.permute.xlu0 %1269
    %v1273 = vlaneseq
    %v1274 = vshrl.u32 %v1273, 7
    %v1275 = vsub.s32 0, %v1274
    %v1276 = vrot.slane %v1081, %v1275
    %v1278 = vmul.f32 %v1085, %v1276
    %v1279 = vmul.f32 %v1090, %v1276
    %v1280 = vmul.f32 %v1095, %v1276
    %v1281 = vmul.f32 %v1100, %v1276
    %v1282 = vmul.f32 %v1105, %v1276
    %v1283 = vmul.f32 %v1110, %v1276
    %v1284 = vmul.f32 %v1115, %v1276
    %v1285 = vmul.f32 %v1120, %v1276
    %v1286 = vmul.f32 %v1125, %v1276
    %v1287 = vmul.f32 %v1130, %v1276
    %v1288 = vmul.f32 %v1135, %v1276
    %v1289 = vmul.f32 %v1140, %v1276
    %v1290 = vmul.f32 %v1145, %v1276
    %v1291 = vmul.f32 %v1150, %v1276
    %v1292 = vmul.f32 %v1155, %v1276
    %v1293 = vmul.f32 %v1160, %v1276
    %v1294 = vmul.f32 %v1165, %v1276
    %v1295 = vmul.f32 %v1170, %v1276
    %v1296 = vmul.f32 %v1175, %v1276
    %v1297 = vmul.f32 %v1180, %v1276
    %v1298 = vmul.f32 %v1185, %v1276
    %v1299 = vmul.f32 %v1190, %v1276
    %v1300 = vmul.f32 %v1195, %v1276
    %v1301 = vmul.f32 %v1200, %v1276
    %v1302 = vmul.f32 %v1205, %v1276
    %v1303 = vmul.f32 %v1210, %v1276
    %v1304 = vmul.f32 %v1215, %v1276
    %v1305 = vmul.f32 %v1220, %v1276
    %v1306 = vmul.f32 %v1225, %v1276
    %v1307 = vmul.f32 %v1230, %v1276
    %v1308 = vmul.f32 %v1235, %v1276
    %v1309 = vmul.f32 %v1240, %v1276
    %v1310 = vmul.f32 %v1245, %v1276
    %v1311 = vmul.f32 %v1250, %v1276
    %v1312 = vmul.f32 %v1255, %v1276
    %v1313 = vmul.f32 %v1260, %v1276
    %v1314 = vmul.f32 %v1265, %v1276
    %v1315 = vmul.f32 %v1270, %v1276
    %v1392 = vunpack.c.l.b16 %v942
    %v1393 = vunpack.c.h.b16 %v942
    %v1394 = vunpack.c.l.b16 %v943
    %v1395 = vunpack.c.h.b16 %v943
    %v1396 = vunpack.c.l.b16 %v944
    %v1397 = vunpack.c.h.b16 %v944
    %v1398 = vunpack.c.l.b16 %v945
    %v1399 = vunpack.c.h.b16 %v945
    %v1400 = vunpack.c.l.b16 %v946
    %v1401 = vunpack.c.h.b16 %v946
    %v1402 = vunpack.c.l.b16 %v947
    %v1403 = vunpack.c.h.b16 %v947
    %v1404 = vunpack.c.l.b16 %v948
    %v1405 = vunpack.c.h.b16 %v948
    %v1406 = vunpack.c.l.b16 %v949
    %v1407 = vunpack.c.h.b16 %v949
    %v1408 = vunpack.c.l.b16 %v950
    %v1409 = vunpack.c.h.b16 %v950
    %v1410 = vunpack.c.l.b16 %v951
    %v1411 = vunpack.c.h.b16 %v951
    %v1412 = vunpack.c.l.b16 %v952
    %v1413 = vunpack.c.h.b16 %v952
    %v1414 = vunpack.c.l.b16 %v953
    %v1415 = vunpack.c.h.b16 %v953
    %v1416 = vunpack.c.l.b16 %v954
    %v1417 = vunpack.c.h.b16 %v954
    %v1418 = vunpack.c.l.b16 %v955
    %v1419 = vunpack.c.h.b16 %v955
    %v1420 = vunpack.c.l.b16 %v956
    %v1421 = vunpack.c.h.b16 %v956
    %v1422 = vunpack.c.l.b16 %v957
    %v1423 = vunpack.c.h.b16 %v957
    %v1424 = vunpack.c.l.b16 %v958
    %v1425 = vunpack.c.h.b16 %v958
    %v1426 = vunpack.c.l.b16 %v959
    %v1427 = vunpack.c.h.b16 %v959
    %v1428 = vunpack.c.l.b16 %v960
    %v1429 = vunpack.c.h.b16 %v960
    %v1430 = vunpack.c.l.b16 %v961
    %v1431 = vunpack.c.h.b16 %v961
    %v1432 = vunpack.c.l.b16 %v962
    %v1433 = vunpack.c.h.b16 %v962
    %v1434 = vunpack.c.l.b16 %v963
    %v1435 = vunpack.c.h.b16 %v963
    %v1436 = vunpack.c.l.b16 %v964
    %v1437 = vunpack.c.h.b16 %v964
    %v1438 = vunpack.c.l.b16 %v965
    %v1439 = vunpack.c.h.b16 %v965
    %v1440 = vunpack.c.l.b16 %v966
    %v1441 = vunpack.c.h.b16 %v966
    %v1442 = vunpack.c.l.b16 %v967
    %v1443 = vunpack.c.h.b16 %v967
    %v1444 = vunpack.c.l.b16 %v968
    %v1445 = vunpack.c.h.b16 %v968
    %v1446 = vunpack.c.l.b16 %v969
    %v1447 = vunpack.c.h.b16 %v969
    %v1448 = vunpack.c.l.b16 %v970
    %v1449 = vunpack.c.h.b16 %v970
    %v1450 = vunpack.c.l.b16 %v971
    %v1451 = vunpack.c.h.b16 %v971
    %v1452 = vunpack.c.l.b16 %v972
    %v1453 = vunpack.c.h.b16 %v972
    %v1454 = vunpack.c.l.b16 %v973
    %v1455 = vunpack.c.h.b16 %v973
    %v1456 = vunpack.c.l.b16 %v974
    %v1457 = vunpack.c.h.b16 %v974
    %v1458 = vunpack.c.l.b16 %v975
    %v1459 = vunpack.c.h.b16 %v975
    %v1460 = vunpack.c.l.b16 %v976
    %v1461 = vunpack.c.h.b16 %v976
    %v1462 = vunpack.c.l.b16 %v977
    %v1463 = vunpack.c.h.b16 %v977
    %v1464 = vunpack.c.l.b16 %v978
    %v1465 = vunpack.c.h.b16 %v978
    %v1466 = vunpack.c.l.b16 %v979
    %v1467 = vunpack.c.h.b16 %v979
    %v1468 = vunpack.c.l.b16 %v980
    %v1469 = vunpack.c.h.b16 %v980
    %v1470 = vunpack.c.l.b16 %v981
    %v1471 = vunpack.c.h.b16 %v981
    %v1472 = vunpack.c.l.b16 %v982
    %v1473 = vunpack.c.h.b16 %v982
    %v1474 = vunpack.c.l.b16 %v983
    %v1475 = vunpack.c.h.b16 %v983
    %v1476 = vunpack.c.l.b16 %v984
    %v1477 = vunpack.c.h.b16 %v984
    %v1478 = vunpack.c.l.b16 %v985
    %v1479 = vunpack.c.h.b16 %v985
    %v1480 = vunpack.c.l.b16 %v986
    %v1481 = vunpack.c.h.b16 %v986
    %v1482 = vunpack.c.l.b16 %v987
    %v1483 = vunpack.c.h.b16 %v987
    %v1484 = vunpack.c.l.b16 %v988
    %v1485 = vunpack.c.h.b16 %v988
    %v1486 = vunpack.c.l.b16 %v989
    %v1487 = vunpack.c.h.b16 %v989
    %v1488 = vunpack.c.l.b16 %v990
    %v1489 = vunpack.c.h.b16 %v990
    %v1490 = vunpack.c.l.b16 %v991
    %v1491 = vunpack.c.h.b16 %v991
    %v1492 = vunpack.c.l.b16 %v992
    %v1493 = vunpack.c.h.b16 %v992
    %v1494 = vunpack.c.l.b16 %v993
    %v1495 = vunpack.c.h.b16 %v993
    %v1496 = vunpack.c.l.b16 %v994
    %v1497 = vunpack.c.h.b16 %v994
    %v1498 = vunpack.c.l.b16 %v995
    %v1499 = vunpack.c.h.b16 %v995
    %v1500 = vunpack.c.l.b16 %v996
    %v1501 = vunpack.c.h.b16 %v996
    %v1502 = vunpack.c.l.b16 %v997
    %v1503 = vunpack.c.h.b16 %v997
    %v1504 = vunpack.c.l.b16 %v998
    %v1505 = vunpack.c.h.b16 %v998
    %v1506 = vunpack.c.l.b16 %v999
    %v1507 = vunpack.c.h.b16 %v999
    %v1508 = vunpack.c.l.b16 %v1000
    %v1509 = vunpack.c.h.b16 %v1000
    %v1510 = vunpack.c.l.b16 %v1001
    %v1511 = vunpack.c.h.b16 %v1001
    %v1512 = vunpack.c.l.b16 %v1002
    %v1513 = vunpack.c.h.b16 %v1002
    %v1514 = vunpack.c.l.b16 %v1003
    %v1515 = vunpack.c.h.b16 %v1003
    %v1516 = vunpack.c.l.b16 %v1004
    %v1517 = vunpack.c.h.b16 %v1004
    %v1518 = vunpack.c.l.b16 %v1005
    %v1519 = vunpack.c.h.b16 %v1005
    %v1520 = vunpack.c.l.b16 %v1006
    %v1521 = vunpack.c.h.b16 %v1006
    %v1522 = vunpack.c.l.b16 %v1007
    %v1523 = vunpack.c.h.b16 %v1007
    %v1524 = vunpack.c.l.b16 %v1008
    %v1525 = vunpack.c.h.b16 %v1008
    %v1526 = vunpack.c.l.b16 %v1009
    %v1527 = vunpack.c.h.b16 %v1009
    %v1528 = vunpack.c.l.b16 %v1010
    %v1529 = vunpack.c.h.b16 %v1010
    %v1530 = vunpack.c.l.b16 %v1011
    %v1531 = vunpack.c.h.b16 %v1011
    %v1532 = vunpack.c.l.b16 %v1012
    %v1533 = vunpack.c.h.b16 %v1012
    %v1534 = vunpack.c.l.b16 %v1013
    %v1535 = vunpack.c.h.b16 %v1013
    %v1536 = vunpack.c.l.b16 %v1014
    %v1537 = vunpack.c.h.b16 %v1014
    %v1538 = vunpack.c.l.b16 %v1015
    %v1539 = vunpack.c.h.b16 %v1015
    %v1540 = vunpack.c.l.b16 %v1016
    %v1541 = vunpack.c.h.b16 %v1016
    %v1542 = vunpack.c.l.b16 %v1017
    %v1543 = vunpack.c.h.b16 %v1017
    %v1544 = vpack.c.b16 %v1396, %v1392
    %v1545 = vpack.c.b16 %v1397, %v1393
    %v1546 = vpack.c.b16 %v1398, %v1394
    %v1547 = vpack.c.b16 %v1399, %v1395
    %v1548 = vpack.c.b16 %v1404, %v1400
    %v1549 = vpack.c.b16 %v1405, %v1401
    %v1550 = vpack.c.b16 %v1406, %v1402
    %v1551 = vpack.c.b16 %v1407, %v1403
    %v1552 = vpack.c.b16 %v1412, %v1408
    %v1553 = vpack.c.b16 %v1413, %v1409
    %v1554 = vpack.c.b16 %v1414, %v1410
    %v1555 = vpack.c.b16 %v1415, %v1411
    %v1556 = vpack.c.b16 %v1420, %v1416
    %v1557 = vpack.c.b16 %v1421, %v1417
    %v1558 = vpack.c.b16 %v1422, %v1418
    %v1559 = vpack.c.b16 %v1423, %v1419
    %v1560 = vpack.c.b16 %v1428, %v1424
    %v1561 = vpack.c.b16 %v1429, %v1425
    %v1562 = vpack.c.b16 %v1430, %v1426
    %v1563 = vpack.c.b16 %v1431, %v1427
    %v1564 = vpack.c.b16 %v1436, %v1432
    %v1565 = vpack.c.b16 %v1437, %v1433
    %v1566 = vpack.c.b16 %v1438, %v1434
    %v1567 = vpack.c.b16 %v1439, %v1435
    %v1568 = vpack.c.b16 %v1444, %v1440
    %v1569 = vpack.c.b16 %v1445, %v1441
    %v1570 = vpack.c.b16 %v1446, %v1442
    %v1571 = vpack.c.b16 %v1447, %v1443
    %v1572 = vpack.c.b16 %v1452, %v1448
    %v1573 = vpack.c.b16 %v1453, %v1449
    %v1574 = vpack.c.b16 %v1454, %v1450
    %v1575 = vpack.c.b16 %v1455, %v1451
    %v1576 = vpack.c.b16 %v1460, %v1456
    %v1577 = vpack.c.b16 %v1461, %v1457
    %v1578 = vpack.c.b16 %v1462, %v1458
    %v1579 = vpack.c.b16 %v1463, %v1459
    %v1580 = vpack.c.b16 %v1468, %v1464
    %v1581 = vpack.c.b16 %v1469, %v1465
    %v1582 = vpack.c.b16 %v1470, %v1466
    %v1583 = vpack.c.b16 %v1471, %v1467
    %v1584 = vpack.c.b16 %v1476, %v1472
    %v1585 = vpack.c.b16 %v1477, %v1473
    %v1586 = vpack.c.b16 %v1478, %v1474
    %v1587 = vpack.c.b16 %v1479, %v1475
    %v1588 = vpack.c.b16 %v1484, %v1480
    %v1589 = vpack.c.b16 %v1485, %v1481
    %v1590 = vpack.c.b16 %v1486, %v1482
    %v1591 = vpack.c.b16 %v1487, %v1483
    %v1592 = vpack.c.b16 %v1492, %v1488
    %v1593 = vpack.c.b16 %v1493, %v1489
    %v1594 = vpack.c.b16 %v1494, %v1490
    %v1595 = vpack.c.b16 %v1495, %v1491
    %v1596 = vpack.c.b16 %v1500, %v1496
    %v1597 = vpack.c.b16 %v1501, %v1497
    %v1598 = vpack.c.b16 %v1502, %v1498
    %v1599 = vpack.c.b16 %v1503, %v1499
    %v1600 = vpack.c.b16 %v1508, %v1504
    %v1601 = vpack.c.b16 %v1509, %v1505
    %v1602 = vpack.c.b16 %v1510, %v1506
    %v1603 = vpack.c.b16 %v1511, %v1507
    %v1604 = vpack.c.b16 %v1516, %v1512
    %v1605 = vpack.c.b16 %v1517, %v1513
    %v1606 = vpack.c.b16 %v1518, %v1514
    %v1607 = vpack.c.b16 %v1519, %v1515
    %v1608 = vpack.c.b16 %v1524, %v1520
    %v1609 = vpack.c.b16 %v1525, %v1521
    %v1610 = vpack.c.b16 %v1526, %v1522
    %v1611 = vpack.c.b16 %v1527, %v1523
    %v1612 = vpack.c.b16 %v1532, %v1528
    %v1613 = vpack.c.b16 %v1533, %v1529
    %v1614 = vpack.c.b16 %v1534, %v1530
    %v1615 = vpack.c.b16 %v1535, %v1531
    %v1616 = vpack.c.b16 %v1540, %v1536
    %v1617 = vpack.c.b16 %v1541, %v1537
    %v1618 = vpack.c.b16 %v1542, %v1538
    %v1619 = vpack.c.b16 %v1543, %v1539
    %vm1677 = vcmask 130048
    %v1679 = vsel %vm1677, %v1547, 0
    %v1682 = vsel %vm1677, %v1551, 0
    %v1685 = vsel %vm1677, %v1555, 0
    %v1688 = vsel %vm1677, %v1559, 0
    %v1691 = vsel %vm1677, %v1563, 0
    %v1694 = vsel %vm1677, %v1567, 0
    %v1697 = vsel %vm1677, %v1571, 0
    %v1700 = vsel %vm1677, %v1575, 0
    %v1703 = vsel %vm1677, %v1579, 0
    %v1706 = vsel %vm1677, %v1583, 0
    %v1709 = vsel %vm1677, %v1587, 0
    %v1712 = vsel %vm1677, %v1591, 0
    %v1715 = vsel %vm1677, %v1595, 0
    %v1718 = vsel %vm1677, %v1599, 0
    %v1721 = vsel %vm1677, %v1603, 0
    %v1724 = vsel %vm1677, %v1607, 0
    %v1727 = vsel %vm1677, %v1611, 0
    %v1730 = vsel %vm1677, %v1615, 0
    %v1733 = vsel %vm1677, %v1619, 0
    %1735 = vmatprep.subr.bf16.mxu0 0
    %1736 = vmatpush1.bf16.msra.mxu0 %v1018
    %1737 = vmatprep.subr.bf16.mxu0 0
    %1738 = vmatpush1.bf16.msra.mxu0 %v1019
    %1739 = vmatprep.subr.bf16.mxu0 0
    %1740 = vmatpush1.bf16.msra.mxu0 %v1020
    %1741 = vmatprep.subr.bf16.mxu0 0
    %1742 = vmatpush1.bf16.msra.mxu0 %v1021
    %1743 = vmatprep.subr.bf16.mxu0 0
    %1744 = vmatpush1.bf16.msra.mxu0 %v1022
    %1745 = vmatprep.subr.bf16.mxu0 0
    %1746 = vmatpush1.bf16.msra.mxu0 %v1023
    %1747 = vmatprep.subr.bf16.mxu0 0
    %1748 = vmatpush1.bf16.msra.mxu0 %v1024
    %1749 = vmatprep.subr.bf16.mxu0 0
    %1750 = vmatpush1.bf16.msra.mxu0 %v1025
    %1751 = vmatprep.subr.bf16.mxu0 0
    %1752 = vmatpush1.bf16.msra.mxu0 %v1026
    %1753 = vmatprep.subr.bf16.mxu0 0
    %1754 = vmatpush1.bf16.msra.mxu0 %v1027
    %1755 = vmatprep.subr.bf16.mxu0 0
    %1756 = vmatpush1.bf16.msra.mxu0 %v1028
    %1757 = vmatprep.subr.bf16.mxu0 0
    %1758 = vmatpush1.bf16.msra.mxu0 %v1029
    %1759 = vmatprep.subr.bf16.mxu0 0
    %1760 = vmatpush1.bf16.msra.mxu0 %v1030
    %1761 = vmatprep.subr.bf16.mxu0 0
    %1762 = vmatpush1.bf16.msra.mxu0 %v1031
    %1763 = vmatprep.subr.bf16.mxu0 0
    %1764 = vmatpush1.bf16.msra.mxu0 %v1032
    %1765 = vmatprep.subr.bf16.mxu0 0
    %1766 = vmatpush1.bf16.msra.mxu0 %v1033
    %1767 = vmatprep.mubr.bf16.mxu0 %v1545
    %1768 = vmatmul.mubr.bf16.gmra.mrb[0].mxu0 %v1544
    %v1769 = vpop.f32.mrb[0].mxu0
    %v1770 = vadd.f32 %v1278, %v1769
    %v1771 = vpop.f32.mrb[0].mxu0
    %v1772 = vpop.f32.mrb[0].mxu0
    %v1773 = vadd.f32 %v1279, %v1772
    %v1774 = vpop.f32.mrb[0].mxu0
    %1775 = vmatprep.mubr.bf16.mxu0 %v1549
    %1776 = vmatmul.mubr.bf16.gmra.mrb[0].mxu0 %v1548
    %v1777 = vpop.f32.mrb[0].mxu0
    %v1778 = vadd.f32 %v1280, %v1777
    %v1779 = vpop.f32.mrb[0].mxu0
    %v1780 = vpop.f32.mrb[0].mxu0
    %v1781 = vadd.f32 %v1281, %v1780
    %v1782 = vpop.f32.mrb[0].mxu0
    %1783 = vmatprep.mubr.bf16.mxu0 %v1553
    %1784 = vmatmul.mubr.bf16.gmra.mrb[0].mxu0 %v1552
    %v1785 = vpop.f32.mrb[0].mxu0
    %v1786 = vadd.f32 %v1282, %v1785
    %v1787 = vpop.f32.mrb[0].mxu0
    %v1788 = vpop.f32.mrb[0].mxu0
    %v1789 = vadd.f32 %v1283, %v1788
    %v1790 = vpop.f32.mrb[0].mxu0
    %1791 = vmatprep.mubr.bf16.mxu0 %v1557
    %1792 = vmatmul.mubr.bf16.gmra.mrb[0].mxu0 %v1556
    %v1793 = vpop.f32.mrb[0].mxu0
    %v1794 = vadd.f32 %v1284, %v1793
    %v1795 = vpop.f32.mrb[0].mxu0
    %v1796 = vpop.f32.mrb[0].mxu0
    %v1797 = vadd.f32 %v1285, %v1796
    %v1798 = vpop.f32.mrb[0].mxu0
    %1799 = vmatprep.mubr.bf16.mxu0 %v1561
    %1800 = vmatmul.mubr.bf16.gmra.mrb[0].mxu0 %v1560
    %v1801 = vpop.f32.mrb[0].mxu0
    %v1802 = vadd.f32 %v1286, %v1801
    %v1803 = vpop.f32.mrb[0].mxu0
    %v1804 = vpop.f32.mrb[0].mxu0
    %v1805 = vadd.f32 %v1287, %v1804
    %v1806 = vpop.f32.mrb[0].mxu0
    %1807 = vmatprep.mubr.bf16.mxu0 %v1565
    %1808 = vmatmul.mubr.bf16.gmra.mrb[0].mxu0 %v1564
    %v1809 = vpop.f32.mrb[0].mxu0
    %v1810 = vadd.f32 %v1288, %v1809
    %v1811 = vpop.f32.mrb[0].mxu0
    %v1812 = vpop.f32.mrb[0].mxu0
    %v1813 = vadd.f32 %v1289, %v1812
    %v1814 = vpop.f32.mrb[0].mxu0
    %1815 = vmatprep.mubr.bf16.mxu0 %v1569
    %1816 = vmatmul.mubr.bf16.gmra.mrb[0].mxu0 %v1568
    %v1817 = vpop.f32.mrb[0].mxu0
    %v1818 = vadd.f32 %v1290, %v1817
    %v1819 = vpop.f32.mrb[0].mxu0
    %v1820 = vpop.f32.mrb[0].mxu0
    %v1821 = vadd.f32 %v1291, %v1820
    %v1822 = vpop.f32.mrb[0].mxu0
    %1823 = vmatprep.mubr.bf16.mxu0 %v1573
    %1824 = vmatmul.mubr.bf16.gmra.mrb[0].mxu0 %v1572
    %v1825 = vpop.f32.mrb[0].mxu0
    %v1826 = vadd.f32 %v1292, %v1825
    %v1827 = vpop.f32.mrb[0].mxu0
    %v1828 = vpop.f32.mrb[0].mxu0
    %v1829 = vadd.f32 %v1293, %v1828
    %v1830 = vpop.f32.mrb[0].mxu0
    %1831 = vmatprep.mubr.bf16.mxu0 %v1577
    %1832 = vmatmul.mubr.bf16.gmra.mrb[0].mxu0 %v1576
    %v1833 = vpop.f32.mrb[0].mxu0
    %v1834 = vadd.f32 %v1294, %v1833
    %v1835 = vpop.f32.mrb[0].mxu0
    %v1836 = vpop.f32.mrb[0].mxu0
    %v1837 = vadd.f32 %v1295, %v1836
    %v1838 = vpop.f32.mrb[0].mxu0
    %1839 = vmatprep.mubr.bf16.mxu0 %v1581
    %1840 = vmatmul.mubr.bf16.gmra.mrb[0].mxu0 %v1580
    %v1841 = vpop.f32.mrb[0].mxu0
    %v1842 = vadd.f32 %v1296, %v1841
    %v1843 = vpop.f32.mrb[0].mxu0
    %v1844 = vpop.f32.mrb[0].mxu0
    %v1845 = vadd.f32 %v1297, %v1844
    %v1846 = vpop.f32.mrb[0].mxu0
    %1847 = vmatprep.mubr.bf16.mxu0 %v1585
    %1848 = vmatmul.mubr.bf16.gmra.mrb[0].mxu0 %v1584
    %v1849 = vpop.f32.mrb[0].mxu0
    %v1850 = vadd.f32 %v1298, %v1849
    %v1851 = vpop.f32.mrb[0].mxu0
    %v1852 = vpop.f32.mrb[0].mxu0
    %v1853 = vadd.f32 %v1299, %v1852
    %v1854 = vpop.f32.mrb[0].mxu0
    %1855 = vmatprep.mubr.bf16.mxu0 %v1589
    %1856 = vmatmul.mubr.bf16.gmra.mrb[0].mxu0 %v1588
    %v1857 = vpop.f32.mrb[0].mxu0
    %v1858 = vadd.f32 %v1300, %v1857
    %v1859 = vpop.f32.mrb[0].mxu0
    %v1860 = vpop.f32.mrb[0].mxu0
    %v1861 = vadd.f32 %v1301, %v1860
    %v1862 = vpop.f32.mrb[0].mxu0
    %1863 = vmatprep.mubr.bf16.mxu0 %v1593
    %1864 = vmatmul.mubr.bf16.gmra.mrb[0].mxu0 %v1592
    %v1865 = vpop.f32.mrb[0].mxu0
    %v1866 = vadd.f32 %v1302, %v1865
    %v1867 = vpop.f32.mrb[0].mxu0
    %v1868 = vpop.f32.mrb[0].mxu0
    %v1869 = vadd.f32 %v1303, %v1868
    %v1870 = vpop.f32.mrb[0].mxu0
    %1871 = vmatprep.mubr.bf16.mxu0 %v1597
    %1872 = vmatmul.mubr.bf16.gmra.mrb[0].mxu0 %v1596
    %v1873 = vpop.f32.mrb[0].mxu0
    %v1874 = vadd.f32 %v1304, %v1873
    %v1875 = vpop.f32.mrb[0].mxu0
    %v1876 = vpop.f32.mrb[0].mxu0
    %v1877 = vadd.f32 %v1305, %v1876
    %v1878 = vpop.f32.mrb[0].mxu0
    %1879 = vmatprep.mubr.bf16.mxu0 %v1601
    %1880 = vmatmul.mubr.bf16.gmra.mrb[0].mxu0 %v1600
    %v1881 = vpop.f32.mrb[0].mxu0
    %v1882 = vadd.f32 %v1306, %v1881
    %v1883 = vpop.f32.mrb[0].mxu0
    %v1884 = vpop.f32.mrb[0].mxu0
    %v1885 = vadd.f32 %v1307, %v1884
    %v1886 = vpop.f32.mrb[0].mxu0
    %1887 = vmatprep.mubr.bf16.mxu0 %v1605
    %1888 = vmatmul.mubr.bf16.gmra.mrb[0].mxu0 %v1604
    %v1889 = vpop.f32.mrb[0].mxu0
    %v1890 = vadd.f32 %v1308, %v1889
    %v1891 = vpop.f32.mrb[0].mxu0
    %v1892 = vpop.f32.mrb[0].mxu0
    %v1893 = vadd.f32 %v1309, %v1892
    %v1894 = vpop.f32.mrb[0].mxu0
    %1895 = vmatprep.mubr.bf16.mxu0 %v1609
    %1896 = vmatmul.mubr.bf16.gmra.mrb[0].mxu0 %v1608
    %v1897 = vpop.f32.mrb[0].mxu0
    %v1898 = vadd.f32 %v1310, %v1897
    %v1899 = vpop.f32.mrb[0].mxu0
    %v1900 = vpop.f32.mrb[0].mxu0
    %v1901 = vadd.f32 %v1311, %v1900
    %v1902 = vpop.f32.mrb[0].mxu0
    %1903 = vmatprep.mubr.bf16.mxu0 %v1613
    %1904 = vmatmul.mubr.bf16.gmra.mrb[0].mxu0 %v1612
    %v1905 = vpop.f32.mrb[0].mxu0
    %v1906 = vadd.f32 %v1312, %v1905
    %v1907 = vpop.f32.mrb[0].mxu0
    %v1908 = vpop.f32.mrb[0].mxu0
    %v1909 = vadd.f32 %v1313, %v1908
    %v1910 = vpop.f32.mrb[0].mxu0
    %1911 = vmatprep.mubr.bf16.mxu0 %v1617
    %1912 = vmatmul.mubr.bf16.gmra.mrb[0].mxu0 %v1616
    %v1913 = vpop.f32.mrb[0].mxu0
    %v1914 = vadd.f32 %v1314, %v1913
    %v1915 = vpop.f32.mrb[0].mxu0
    %v1916 = vpop.f32.mrb[0].mxu0
    %v1917 = vadd.f32 %v1315, %v1916
    %v1918 = vpop.f32.mrb[0].mxu0
    %1919 = vdwg.mxu0
    %1920 = vmatprep.subr.bf16.mxu0 0
    %1921 = vmatpush1.bf16.msra.mxu0 %v1034
    %1922 = vmatprep.subr.bf16.mxu0 0
    %1923 = vmatpush1.bf16.msra.mxu0 %v1035
    %1924 = vmatprep.subr.bf16.mxu0 0
    %1925 = vmatpush1.bf16.msra.mxu0 %v1036
    %1926 = vmatprep.subr.bf16.mxu0 0
    %1927 = vmatpush1.bf16.msra.mxu0 %v1037
    %1928 = vmatprep.subr.bf16.mxu0 0
    %1929 = vmatpush1.bf16.msra.mxu0 %v1038
    %1930 = vmatprep.subr.bf16.mxu0 0
    %1931 = vmatpush1.bf16.msra.mxu0 %v1039
    %1932 = vmatprep.subr.bf16.mxu0 0
    %1933 = vmatpush1.bf16.msra.mxu0 %v1040
    %1934 = vmatprep.subr.bf16.mxu0 0
    %1935 = vmatpush1.bf16.msra.mxu0 %v1041
    %1936 = vmatprep.subr.bf16.mxu0 0
    %1937 = vmatpush1.bf16.msra.mxu0 %v1042
    %1938 = vmatprep.subr.bf16.mxu0 0
    %1939 = vmatpush1.bf16.msra.mxu0 0
    %1940 = vmatprep.subr.bf16.mxu0 0
    %1941 = vmatpush1.bf16.msra.mxu0 0
    %1942 = vmatprep.subr.bf16.mxu0 0
    %1943 = vmatpush1.bf16.msra.mxu0 0
    %1944 = vmatprep.subr.bf16.mxu0 0
    %1945 = vmatpush1.bf16.msra.mxu0 0
    %1946 = vmatprep.subr.bf16.mxu0 0
    %1947 = vmatpush1.bf16.msra.mxu0 0
    %1948 = vmatprep.subr.bf16.mxu0 0
    %1949 = vmatpush1.bf16.msra.mxu0 0
    %1950 = vmatprep.subr.bf16.mxu0 0
    %1951 = vmatpush1.bf16.msra.mxu0 0
    %1952 = vmatprep.mubr.bf16.mxu0 %v1679
    %1953 = vmatmul.mubr.bf16.gmra.mrb[0].mxu0 %v1546
    %v1954 = vpop.f32.mrb[0].mxu0
    %v1955 = vadd.f32 %v1770, %v1954
    %v1956 = vpop.f32.mrb[0].mxu0
    %v1957 = vpop.f32.mrb[0].mxu0
    %v1958 = vadd.f32 %v1773, %v1957
    %v1959 = vpop.f32.mrb[0].mxu0
    %1960 = vmatprep.mubr.bf16.mxu0 %v1682
    %1961 = vmatmul.mubr.bf16.gmra.mrb[0].mxu0 %v1550
    %v1962 = vpop.f32.mrb[0].mxu0
    %v1963 = vadd.f32 %v1778, %v1962
    %v1964 = vpop.f32.mrb[0].mxu0
    %v1965 = vpop.f32.mrb[0].mxu0
    %v1966 = vadd.f32 %v1781, %v1965
    %v1967 = vpop.f32.mrb[0].mxu0
    %1968 = vmatprep.mubr.bf16.mxu0 %v1685
    %1969 = vmatmul.mubr.bf16.gmra.mrb[0].mxu0 %v1554
    %v1970 = vpop.f32.mrb[0].mxu0
    %v1971 = vadd.f32 %v1786, %v1970
    %v1972 = vpop.f32.mrb[0].mxu0
    %v1973 = vpop.f32.mrb[0].mxu0
    %v1974 = vadd.f32 %v1789, %v1973
    %v1975 = vpop.f32.mrb[0].mxu0
    %1976 = vmatprep.mubr.bf16.mxu0 %v1688
    %1977 = vmatmul.mubr.bf16.gmra.mrb[0].mxu0 %v1558
    %v1978 = vpop.f32.mrb[0].mxu0
    %v1979 = vadd.f32 %v1794, %v1978
    %v1980 = vpop.f32.mrb[0].mxu0
    %v1981 = vpop.f32.mrb[0].mxu0
    %v1982 = vadd.f32 %v1797, %v1981
    %v1983 = vpop.f32.mrb[0].mxu0
    %1984 = vmatprep.mubr.bf16.mxu0 %v1691
    %1985 = vmatmul.mubr.bf16.gmra.mrb[0].mxu0 %v1562
    %v1986 = vpop.f32.mrb[0].mxu0
    %v1987 = vadd.f32 %v1802, %v1986
    %v1988 = vpop.f32.mrb[0].mxu0
    %v1989 = vpop.f32.mrb[0].mxu0
    %v1990 = vadd.f32 %v1805, %v1989
    %v1991 = vpop.f32.mrb[0].mxu0
    %1992 = vmatprep.mubr.bf16.mxu0 %v1694
    %1993 = vmatmul.mubr.bf16.gmra.mrb[0].mxu0 %v1566
    %v1994 = vpop.f32.mrb[0].mxu0
    %v1995 = vadd.f32 %v1810, %v1994
    %v1996 = vpop.f32.mrb[0].mxu0
    %v1997 = vpop.f32.mrb[0].mxu0
    %v1998 = vadd.f32 %v1813, %v1997
    %v1999 = vpop.f32.mrb[0].mxu0
    %2000 = vmatprep.mubr.bf16.mxu0 %v1697
    %2001 = vmatmul.mubr.bf16.gmra.mrb[0].mxu0 %v1570
    %v2002 = vpop.f32.mrb[0].mxu0
    %v2003 = vadd.f32 %v1818, %v2002
    %v2004 = vpop.f32.mrb[0].mxu0
    %v2005 = vpop.f32.mrb[0].mxu0
    %v2006 = vadd.f32 %v1821, %v2005
    %v2007 = vpop.f32.mrb[0].mxu0
    %2008 = vmatprep.mubr.bf16.mxu0 %v1700
    %2009 = vmatmul.mubr.bf16.gmra.mrb[0].mxu0 %v1574
    %v2010 = vpop.f32.mrb[0].mxu0
    %v2011 = vadd.f32 %v1826, %v2010
    %v2012 = vpop.f32.mrb[0].mxu0
    %v2013 = vpop.f32.mrb[0].mxu0
    %v2014 = vadd.f32 %v1829, %v2013
    %v2015 = vpop.f32.mrb[0].mxu0
    %2016 = vmatprep.mubr.bf16.mxu0 %v1703
    %2017 = vmatmul.mubr.bf16.gmra.mrb[0].mxu0 %v1578
    %v2018 = vpop.f32.mrb[0].mxu0
    %v2019 = vadd.f32 %v1834, %v2018
    %v2020 = vpop.f32.mrb[0].mxu0
    %v2021 = vpop.f32.mrb[0].mxu0
    %v2022 = vadd.f32 %v1837, %v2021
    %v2023 = vpop.f32.mrb[0].mxu0
    %2024 = vmatprep.mubr.bf16.mxu0 %v1706
    %2025 = vmatmul.mubr.bf16.gmra.mrb[0].mxu0 %v1582
    %v2026 = vpop.f32.mrb[0].mxu0
    %v2027 = vadd.f32 %v1842, %v2026
    %v2028 = vpop.f32.mrb[0].mxu0
    %v2029 = vpop.f32.mrb[0].mxu0
    %v2030 = vadd.f32 %v1845, %v2029
    %v2031 = vpop.f32.mrb[0].mxu0
    %2032 = vmatprep.mubr.bf16.mxu0 %v1709
    %2033 = vmatmul.mubr.bf16.gmra.mrb[0].mxu0 %v1586
    %v2034 = vpop.f32.mrb[0].mxu0
    %v2035 = vadd.f32 %v1850, %v2034
    %v2036 = vpop.f32.mrb[0].mxu0
    %v2037 = vpop.f32.mrb[0].mxu0
    %v2038 = vadd.f32 %v1853, %v2037
    %v2039 = vpop.f32.mrb[0].mxu0
    %2040 = vmatprep.mubr.bf16.mxu0 %v1712
    %2041 = vmatmul.mubr.bf16.gmra.mrb[0].mxu0 %v1590
    %v2042 = vpop.f32.mrb[0].mxu0
    %v2043 = vadd.f32 %v1858, %v2042
    %v2044 = vpop.f32.mrb[0].mxu0
    %v2045 = vpop.f32.mrb[0].mxu0
    %v2046 = vadd.f32 %v1861, %v2045
    %v2047 = vpop.f32.mrb[0].mxu0
    %2048 = vmatprep.mubr.bf16.mxu0 %v1715
    %2049 = vmatmul.mubr.bf16.gmra.mrb[0].mxu0 %v1594
    %v2050 = vpop.f32.mrb[0].mxu0
    %v2051 = vadd.f32 %v1866, %v2050
    %v2052 = vpop.f32.mrb[0].mxu0
    %v2053 = vpop.f32.mrb[0].mxu0
    %v2054 = vadd.f32 %v1869, %v2053
    %v2055 = vpop.f32.mrb[0].mxu0
    %2056 = vmatprep.mubr.bf16.mxu0 %v1718
    %2057 = vmatmul.mubr.bf16.gmra.mrb[0].mxu0 %v1598
    %v2058 = vpop.f32.mrb[0].mxu0
    %v2059 = vadd.f32 %v1874, %v2058
    %v2060 = vpop.f32.mrb[0].mxu0
    %v2061 = vpop.f32.mrb[0].mxu0
    %v2062 = vadd.f32 %v1877, %v2061
    %v2063 = vpop.f32.mrb[0].mxu0
    %2064 = vmatprep.mubr.bf16.mxu0 %v1721
    %2065 = vmatmul.mubr.bf16.gmra.mrb[0].mxu0 %v1602
    %v2066 = vpop.f32.mrb[0].mxu0
    %v2067 = vadd.f32 %v1882, %v2066
    %v2068 = vpop.f32.mrb[0].mxu0
    %v2069 = vpop.f32.mrb[0].mxu0
    %v2070 = vadd.f32 %v1885, %v2069
    %v2071 = vpop.f32.mrb[0].mxu0
    %2072 = vmatprep.mubr.bf16.mxu0 %v1724
    %2073 = vmatmul.mubr.bf16.gmra.mrb[0].mxu0 %v1606
    %v2074 = vpop.f32.mrb[0].mxu0
    %v2075 = vadd.f32 %v1890, %v2074
    %v2076 = vpop.f32.mrb[0].mxu0
    %v2077 = vpop.f32.mrb[0].mxu0
    %v2078 = vadd.f32 %v1893, %v2077
    %v2079 = vpop.f32.mrb[0].mxu0
    %2080 = vmatprep.mubr.bf16.mxu0 %v1727
    %2081 = vmatmul.mubr.bf16.gmra.mrb[0].mxu0 %v1610
    %v2082 = vpop.f32.mrb[0].mxu0
    %v2083 = vadd.f32 %v1898, %v2082
    %v2084 = vpop.f32.mrb[0].mxu0
    %v2085 = vpop.f32.mrb[0].mxu0
    %v2086 = vadd.f32 %v1901, %v2085
    %v2087 = vpop.f32.mrb[0].mxu0
    %2088 = vmatprep.mubr.bf16.mxu0 %v1730
    %2089 = vmatmul.mubr.bf16.gmra.mrb[0].mxu0 %v1614
    %v2090 = vpop.f32.mrb[0].mxu0
    %v2091 = vadd.f32 %v1906, %v2090
    %v2092 = vpop.f32.mrb[0].mxu0
    %v2093 = vpop.f32.mrb[0].mxu0
    %v2094 = vadd.f32 %v1909, %v2093
    %v2095 = vpop.f32.mrb[0].mxu0
    %2096 = vmatprep.mubr.bf16.mxu0 %v1733
    %2097 = vmatmul.mubr.bf16.gmra.mrb[0].mxu0 %v1618
    %v2098 = vpop.f32.mrb[0].mxu0
    %v2099 = vadd.f32 %v1914, %v2098
    %v2100 = vpop.f32.mrb[0].mxu0
    %v2101 = vpop.f32.mrb[0].mxu0
    %v2102 = vadd.f32 %v1917, %v2101
    %v2103 = vpop.f32.mrb[0].mxu0
    %2104 = vdwg.mxu0
    %v2105 = vld [vmem:[#allocation10] sm:$0xff]
    %v2106 = vld [vmem:[#allocation10 + $0x8] sm:$0xff]
    %v2107 = vld [vmem:[#allocation10 + $0x10] sm:$0xff]
    %v2108 = vld [vmem:[#allocation10 + $0x18] sm:$0xff]
    %v2109 = vld [vmem:[#allocation10 + $0x20] sm:$0xff]
    %v2110 = vld [vmem:[#allocation10 + $0x28] sm:$0xff]
    %v2111 = vld [vmem:[#allocation10 + $0x30] sm:$0xff]
    %v2112 = vld [vmem:[#allocation10 + $0x38] sm:$0xff]
    %v2113 = vld [vmem:[#allocation10 + $0x40] sm:$0xff]
    %v2114 = vld [vmem:[#allocation10 + $0x48] sm:$0xff]
    %v2115 = vld [vmem:[#allocation10 + $0x50] sm:$0xff]
    %v2116 = vld [vmem:[#allocation10 + $0x58] sm:$0xff]
    %v2117 = vld [vmem:[#allocation10 + $0x60] sm:$0xff]
    %v2118 = vld [vmem:[#allocation10 + $0x68] sm:$0xff]
    %v2119 = vld [vmem:[#allocation10 + $0x70] sm:$0xff]
    %v2120 = vld [vmem:[#allocation10 + $0x78] sm:$0xff]
    %v2121 = vld [vmem:[#allocation10 + $0x80] sm:$0xff]
    %v2122 = vld [vmem:[#allocation10 + $0x88] sm:$0xff]
    %v2123 = vld [vmem:[#allocation10 + $0x90] sm:$0xff]
    %v2124 = vld [vmem:[#allocation10 + $0x98] sm:$0xff]
    %v2125 = vld [vmem:[#allocation10 + $0xa0] sm:$0xff]
    %v2126 = vld [vmem:[#allocation10 + $0xa8] sm:$0xff]
    %v2127 = vld [vmem:[#allocation10 + $0xb0] sm:$0xff]
    %v2128 = vld [vmem:[#allocation10 + $0xb8] sm:$0xff]
    %v2129 = vld [vmem:[#allocation10 + $0xc0] sm:$0xff]
    %v2130 = vld [vmem:[#allocation10 + $0xc8] sm:$0xff]
    %v2131 = vld [vmem:[#allocation10 + $0xd0] sm:$0xff]
    %v2132 = vld [vmem:[#allocation10 + $0xd8] sm:$0xff]
    %v2133 = vld [vmem:[#allocation10 + $0xe0] sm:$0xff]
    %v2134 = vld [vmem:[#allocation10 + $0xe8] sm:$0xff]
    %v2135 = vld [vmem:[#allocation10 + $0xf0] sm:$0xff]
    %v2136 = vld [vmem:[#allocation10 + $0xf8] sm:$0xff]
    %v2137 = vld [vmem:[#allocation10 + $0x100] sm:$0xff]
    %v2138 = vld [vmem:[#allocation10 + $0x108] sm:$0xff]
    %v2139 = vld [vmem:[#allocation10 + $0x110] sm:$0xff]
    %v2140 = vld [vmem:[#allocation10 + $0x118] sm:$0xff]
    %v2141 = vld [vmem:[#allocation10 + $0x120] sm:$0xff]
    %v2142 = vld [vmem:[#allocation10 + $0x128] sm:$0xf]
    %2144 = vset.pattern.permute.xlu0 0
    %2145 = vperm.xlu0 %2144, %v2105
    %v2146 = vpop.permute.xlu0 %2145
    %2149 = vset.pattern.permute.xlu0 0
    %2150 = vperm.xlu0 %2149, %v2106
    %v2151 = vpop.permute.xlu0 %2150
    %2154 = vset.pattern.permute.xlu0 0
    %2155 = vperm.xlu0 %2154, %v2107
    %v2156 = vpop.permute.xlu0 %2155
    %2159 = vset.pattern.permute.xlu0 0
    %2160 = vperm.xlu0 %2159, %v2108
    %v2161 = vpop.permute.xlu0 %2160
    %2164 = vset.pattern.permute.xlu0 0
    %2165 = vperm.xlu0 %2164, %v2109
    %v2166 = vpop.permute.xlu0 %2165
    %2169 = vset.pattern.permute.xlu0 0
    %2170 = vperm.xlu0 %2169, %v2110
    %v2171 = vpop.permute.xlu0 %2170
    %2174 = vset.pattern.permute.xlu0 0
    %2175 = vperm.xlu0 %2174, %v2111
    %v2176 = vpop.permute.xlu0 %2175
    %2179 = vset.pattern.permute.xlu0 0
    %2180 = vperm.xlu0 %2179, %v2112
    %v2181 = vpop.permute.xlu0 %2180
    %2184 = vset.pattern.permute.xlu0 0
    %2185 = vperm.xlu0 %2184, %v2113
    %v2186 = vpop.permute.xlu0 %2185
    %2189 = vset.pattern.permute.xlu0 0
    %2190 = vperm.xlu0 %2189, %v2114
    %v2191 = vpop.permute.xlu0 %2190
    %2194 = vset.pattern.permute.xlu0 0
    %2195 = vperm.xlu0 %2194, %v2115
    %v2196 = vpop.permute.xlu0 %2195
    %2199 = vset.pattern.permute.xlu0 0
    %2200 = vperm.xlu0 %2199, %v2116
    %v2201 = vpop.permute.xlu0 %2200
    %2204 = vset.pattern.permute.xlu0 0
    %2205 = vperm.xlu0 %2204, %v2117
    %v2206 = vpop.permute.xlu0 %2205
    %2209 = vset.pattern.permute.xlu0 0
    %2210 = vperm.xlu0 %2209, %v2118
    %v2211 = vpop.permute.xlu0 %2210
    %2214 = vset.pattern.permute.xlu0 0
    %2215 = vperm.xlu0 %2214, %v2119
    %v2216 = vpop.permute.xlu0 %2215
    %2219 = vset.pattern.permute.xlu0 0
    %2220 = vperm.xlu0 %2219, %v2120
    %v2221 = vpop.permute.xlu0 %2220
    %2224 = vset.pattern.permute.xlu0 0
    %2225 = vperm.xlu0 %2224, %v2121
    %v2226 = vpop.permute.xlu0 %2225
    %2229 = vset.pattern.permute.xlu0 0
    %2230 = vperm.xlu0 %2229, %v2122
    %v2231 = vpop.permute.xlu0 %2230
    %2234 = vset.pattern.permute.xlu0 0
    %2235 = vperm.xlu0 %2234, %v2123
    %v2236 = vpop.permute.xlu0 %2235
    %2239 = vset.pattern.permute.xlu0 0
    %2240 = vperm.xlu0 %2239, %v2124
    %v2241 = vpop.permute.xlu0 %2240
    %2244 = vset.pattern.permute.xlu0 0
    %2245 = vperm.xlu0 %2244, %v2125
    %v2246 = vpop.permute.xlu0 %2245
    %2249 = vset.pattern.permute.xlu0 0
    %2250 = vperm.xlu0 %2249, %v2126
    %v2251 = vpop.permute.xlu0 %2250
    %2254 = vset.pattern.permute.xlu0 0
    %2255 = vperm.xlu0 %2254, %v2127
    %v2256 = vpop.permute.xlu0 %2255
    %2259 = vset.pattern.permute.xlu0 0
    %2260 = vperm.xlu0 %2259, %v2128
    %v2261 = vpop.permute.xlu0 %2260
    %2264 = vset.pattern.permute.xlu0 0
    %2265 = vperm.xlu0 %2264, %v2129
    %v2266 = vpop.permute.xlu0 %2265
    %2269 = vset.pattern.permute.xlu0 0
    %2270 = vperm.xlu0 %2269, %v2130
    %v2271 = vpop.permute.xlu0 %2270
    %2274 = vset.pattern.permute.xlu0 0
    %2275 = vperm.xlu0 %2274, %v2131
    %v2276 = vpop.permute.xlu0 %2275
    %2279 = vset.pattern.permute.xlu0 0
    %2280 = vperm.xlu0 %2279, %v2132
    %v2281 = vpop.permute.xlu0 %2280
    %2284 = vset.pattern.permute.xlu0 0
    %2285 = vperm.xlu0 %2284, %v2133
    %v2286 = vpop.permute.xlu0 %2285
    %2289 = vset.pattern.permute.xlu0 0
    %2290 = vperm.xlu0 %2289, %v2134
    %v2291 = vpop.permute.xlu0 %2290
    %2294 = vset.pattern.permute.xlu0 0
    %2295 = vperm.xlu0 %2294, %v2135
    %v2296 = vpop.permute.xlu0 %2295
    %2299 = vset.pattern.permute.xlu0 0
    %2300 = vperm.xlu0 %2299, %v2136
    %v2301 = vpop.permute.xlu0 %2300
    %2304 = vset.pattern.permute.xlu0 0
    %2305 = vperm.xlu0 %2304, %v2137
    %v2306 = vpop.permute.xlu0 %2305
    %2309 = vset.pattern.permute.xlu0 0
    %2310 = vperm.xlu0 %2309, %v2138
    %v2311 = vpop.permute.xlu0 %2310
    %2314 = vset.pattern.permute.xlu0 0
    %2315 = vperm.xlu0 %2314, %v2139
    %v2316 = vpop.permute.xlu0 %2315
    %2319 = vset.pattern.permute.xlu0 0
    %2320 = vperm.xlu0 %2319, %v2140
    %v2321 = vpop.permute.xlu0 %2320
    %2324 = vset.pattern.permute.xlu0 0
    %2325 = vperm.xlu0 %2324, %v2141
    %v2326 = vpop.permute.xlu0 %2325
    %2329 = vset.pattern.permute.xlu0 0
    %2330 = vperm.xlu0 %2329, %v2142
    %v2331 = vpop.permute.xlu0 %2330
    %v2333 = vadd.f32 %v1955, %v2146
    %v2334 = vadd.f32 %v1958, %v2151
    %v2335 = vadd.f32 %v1963, %v2156
    %v2336 = vadd.f32 %v1966, %v2161
    %v2337 = vadd.f32 %v1971, %v2166
    %v2338 = vadd.f32 %v1974, %v2171
    %v2339 = vadd.f32 %v1979, %v2176
    %v2340 = vadd.f32 %v1982, %v2181
    %v2341 = vadd.f32 %v1987, %v2186
    %v2342 = vadd.f32 %v1990, %v2191
    %v2343 = vadd.f32 %v1995, %v2196
    %v2344 = vadd.f32 %v1998, %v2201
    %v2345 = vadd.f32 %v2003, %v2206
    %v2346 = vadd.f32 %v2006, %v2211
    %v2347 = vadd.f32 %v2011, %v2216
    %v2348 = vadd.f32 %v2014, %v2221
    %v2349 = vadd.f32 %v2019, %v2226
    %v2350 = vadd.f32 %v2022, %v2231
    %v2351 = vadd.f32 %v2027, %v2236
    %v2352 = vadd.f32 %v2030, %v2241
    %v2353 = vadd.f32 %v2035, %v2246
    %v2354 = vadd.f32 %v2038, %v2251
    %v2355 = vadd.f32 %v2043, %v2256
    %v2356 = vadd.f32 %v2046, %v2261
    %v2357 = vadd.f32 %v2051, %v2266
    %v2358 = vadd.f32 %v2054, %v2271
    %v2359 = vadd.f32 %v2059, %v2276
    %v2360 = vadd.f32 %v2062, %v2281
    %v2361 = vadd.f32 %v2067, %v2286
    %v2362 = vadd.f32 %v2070, %v2291
    %v2363 = vadd.f32 %v2075, %v2296
    %v2364 = vadd.f32 %v2078, %v2301
    %v2365 = vadd.f32 %v2083, %v2306
    %v2366 = vadd.f32 %v2086, %v2311
    %v2367 = vadd.f32 %v2091, %v2316
    %v2368 = vadd.f32 %v2094, %v2321
    %v2369 = vadd.f32 %v2099, %v2326
    %v2370 = vadd.f32 %v2102, %v2331
    %v2371 = vmax.f32 %v2333, 0.0
    %v2372 = vmax.f32 %v2334, 0.0
    %v2373 = vmax.f32 %v2335, 0.0
    %v2374 = vmax.f32 %v2336, 0.0
    %v2375 = vmax.f32 %v2337, 0.0
    %v2376 = vmax.f32 %v2338, 0.0
    %v2377 = vmax.f32 %v2339, 0.0
    %v2378 = vmax.f32 %v2340, 0.0
    %v2379 = vmax.f32 %v2341, 0.0
    %v2380 = vmax.f32 %v2342, 0.0
    %v2381 = vmax.f32 %v2343, 0.0
    %v2382 = vmax.f32 %v2344, 0.0
    %v2383 = vmax.f32 %v2345, 0.0
    %v2384 = vmax.f32 %v2346, 0.0
    %v2385 = vmax.f32 %v2347, 0.0
    %v2386 = vmax.f32 %v2348, 0.0
    %v2387 = vmax.f32 %v2349, 0.0
    %v2388 = vmax.f32 %v2350, 0.0
    %v2389 = vmax.f32 %v2351, 0.0
    %v2390 = vmax.f32 %v2352, 0.0
    %v2391 = vmax.f32 %v2353, 0.0
    %v2392 = vmax.f32 %v2354, 0.0
    %v2393 = vmax.f32 %v2355, 0.0
    %v2394 = vmax.f32 %v2356, 0.0
    %v2395 = vmax.f32 %v2357, 0.0
    %v2396 = vmax.f32 %v2358, 0.0
    %v2397 = vmax.f32 %v2359, 0.0
    %v2398 = vmax.f32 %v2360, 0.0
    %v2399 = vmax.f32 %v2361, 0.0
    %v2400 = vmax.f32 %v2362, 0.0
    %v2401 = vmax.f32 %v2363, 0.0
    %v2402 = vmax.f32 %v2364, 0.0
    %v2403 = vmax.f32 %v2365, 0.0
    %v2404 = vmax.f32 %v2366, 0.0
    %v2405 = vmax.f32 %v2367, 0.0
    %v2406 = vmax.f32 %v2368, 0.0
    %v2407 = vmax.f32 %v2369, 0.0
    %v2408 = vmax.f32 %v2370, 0.0
    %v2409 = vld [vmem:[%s7] sm:$0x7]
    %v2410 = vpack.c.bf16 %v2372, %v2371
    %v2411 = vpack.c.bf16 %v2374, %v2373
    %v2412 = vpack.c.bf16 %v2376, %v2375
    %v2413 = vpack.c.bf16 %v2378, %v2377
    %v2414 = vpack.c.bf16 %v2380, %v2379
    %v2415 = vpack.c.bf16 %v2382, %v2381
    %v2416 = vpack.c.bf16 %v2384, %v2383
    %v2417 = vpack.c.bf16 %v2386, %v2385
    %v2418 = vpack.c.bf16 %v2388, %v2387
    %v2419 = vpack.c.bf16 %v2390, %v2389
    %v2420 = vpack.c.bf16 %v2392, %v2391
    %v2421 = vpack.c.bf16 %v2394, %v2393
    %v2422 = vpack.c.bf16 %v2396, %v2395
    %v2423 = vpack.c.bf16 %v2398, %v2397
    %v2424 = vpack.c.bf16 %v2400, %v2399
    %v2425 = vpack.c.bf16 %v2402, %v2401
    %v2426 = vpack.c.bf16 %v2404, %v2403
    %v2427 = vpack.c.bf16 %v2406, %v2405
    %v2428 = vpack.c.bf16 %v2408, %v2407
    %v2429 = vld [vmem:[#allocation2] sm:$0x1]
    %2431 = vset.pattern.permute.xlu0 0
    %2432 = vperm.xlu0 %2431, %v2429
    %v2433 = vpop.permute.xlu0 %2432
    %v2435 = vlaneseq
    %v2436 = vshrl.u32 %v2435, 7
    %v2437 = vsub.s32 0, %v2436
    %v2438 = vrot.slane %v2433, %v2437
    %v2441 = vunpack.c.l.s4 1966171168
    %v2442 = vunpack.c.0.s8 %v2441
    %v2443 = vlaneseq
    %v2444 = vshrl.u32 %v2443, 7
    %v2445 = vsub.s32 %v2442, %v2444
    %v2446 = vrot.slane %v2409, %v2445
    %v2447 = vcombine.high %v2446, %v2446
    %v2449 = vunpack.c.l.s4 1966171168
    %v2450 = vunpack.c.0.s8 %v2449
    %v2451 = vlaneseq
    %v2452 = vshrl.u32 %v2451, 7
    %v2453 = vsub.s32 %v2450, %v2452
    %v2454 = vrot.slane %v2446, %v2453
    %v2456 = vunpack.c.l.s4 1966171168
    %v2457 = vunpack.c.0.s8 %v2456
    %v2458 = vlaneseq
    %v2459 = vshrl.u32 %v2458, 7
    %v2460 = vsub.s32 %v2457, %v2459
    %v2461 = vrot.slane %v2447, %v2460
    %v2462 = vcombine.high %v2454, %v2454
    %vm2465 = vcmask 359424
    %v2467 = vsel %vm2465, %v2462, 0
    %vm2469 = vcmask 1045504
    %v2471 = vsel %vm2469, %v2428, 0
    %2473 = vmatprep.subr.bf16.mxu0 0
    %2474 = vmatpush1.bf16.msra.mxu0 %v2410
    %2475 = vmatprep.subr.bf16.mxu0 0
    %2476 = vmatpush1.bf16.msra.mxu0 %v2411
    %2477 = vmatprep.subr.bf16.mxu0 0
    %2478 = vmatpush1.bf16.msra.mxu0 %v2412
    %2479 = vmatprep.subr.bf16.mxu0 0
    %2480 = vmatpush1.bf16.msra.mxu0 %v2413
    %2481 = vmatprep.subr.bf16.mxu0 0
    %2482 = vmatpush1.bf16.msra.mxu0 %v2414
    %2483 = vmatprep.subr.bf16.mxu0 0
    %2484 = vmatpush1.bf16.msra.mxu0 %v2415
    %2485 = vmatprep.subr.bf16.mxu0 0
    %2486 = vmatpush1.bf16.msra.mxu0 %v2416
    %2487 = vmatprep.subr.bf16.mxu0 0
    %2488 = vmatpush1.bf16.msra.mxu0 %v2417
    %2489 = vmatprep.subr.bf16.mxu0 0
    %2490 = vmatpush1.bf16.msra.mxu0 %v2418
    %2491 = vmatprep.subr.bf16.mxu0 0
    %2492 = vmatpush1.bf16.msra.mxu0 %v2419
    %2493 = vmatprep.subr.bf16.mxu0 0
    %2494 = vmatpush1.bf16.msra.mxu0 %v2420
    %2495 = vmatprep.subr.bf16.mxu0 0
    %2496 = vmatpush1.bf16.msra.mxu0 %v2421
    %2497 = vmatprep.subr.bf16.mxu0 0
    %2498 = vmatpush1.bf16.msra.mxu0 %v2422
    %2499 = vmatprep.subr.bf16.mxu0 0
    %2500 = vmatpush1.bf16.msra.mxu0 %v2423
    %2501 = vmatprep.subr.bf16.mxu0 0
    %2502 = vmatpush1.bf16.msra.mxu0 %v2424
    %2503 = vmatprep.subr.bf16.mxu0 0
    %2504 = vmatpush1.bf16.msra.mxu0 %v2425
    %2505 = vmatprep.mubr.bf16.mxu0 %v2461
    %2506 = vmatmul.mubr.bf16.gmra.mrb[0].mxu0 %v2454
    %v2507 = vpop.f32.mrb[0].mxu0
    %v2508 = vadd.f32 %v2438, %v2507
    %v2509 = vpop.f32.mrb[0].mxu0
    %v2510 = vpop.f32.mrb[0].mxu0
    %v2511 = vpop.f32.mrb[0].mxu0
    %2512 = vdwg.mxu0
    %2513 = vmatprep.subr.bf16.mxu0 0
    %2514 = vmatpush1.bf16.msra.mxu0 %v2426
    %2515 = vmatprep.subr.bf16.mxu0 0
    %2516 = vmatpush1.bf16.msra.mxu0 %v2427
    %2517 = vmatprep.subr.bf16.mxu0 0
    %2518 = vmatpush1.bf16.msra.mxu0 %v2471
    %2519 = vmatprep.subr.bf16.mxu0 0
    %2520 = vmatpush1.bf16.msra.mxu0 0
    %2521 = vmatprep.subr.bf16.mxu0 0
    %2522 = vmatpush1.bf16.msra.mxu0 0
    %2523 = vmatprep.subr.bf16.mxu0 0
    %2524 = vmatpush1.bf16.msra.mxu0 0
    %2525 = vmatprep.subr.bf16.mxu0 0
    %2526 = vmatpush1.bf16.msra.mxu0 0
    %2527 = vmatprep.subr.bf16.mxu0 0
    %2528 = vmatpush1.bf16.msra.mxu0 0
    %2529 = vmatprep.subr.bf16.mxu0 0
    %2530 = vmatpush1.bf16.msra.mxu0 0
    %2531 = vmatprep.subr.bf16.mxu0 0
    %2532 = vmatpush1.bf16.msra.mxu0 0
    %2533 = vmatprep.subr.bf16.mxu0 0
    %2534 = vmatpush1.bf16.msra.mxu0 0
    %2535 = vmatprep.subr.bf16.mxu0 0
    %2536 = vmatpush1.bf16.msra.mxu0 0
    %2537 = vmatprep.subr.bf16.mxu0 0
    %2538 = vmatpush1.bf16.msra.mxu0 0
    %2539 = vmatprep.subr.bf16.mxu0 0
    %2540 = vmatpush1.bf16.msra.mxu0 0
    %2541 = vmatprep.subr.bf16.mxu0 0
    %2542 = vmatpush1.bf16.msra.mxu0 0
    %2543 = vmatprep.subr.bf16.mxu0 0
    %2544 = vmatpush1.bf16.msra.mxu0 0
    %2545 = vmatprep.mubr.bf16.mxu0 0
    %2546 = vmatmul.mubr.bf16.gmra.mrb[0].mxu0 %v2467
    %v2547 = vpop.f32.mrb[0].mxu0
    %v2548 = vadd.f32 %v2508, %v2547
    %v2549 = vpop.f32.mrb[0].mxu0
    %v2550 = vpop.f32.mrb[0].mxu0
    %v2551 = vpop.f32.mrb[0].mxu0
    %2552 = vdwg.mxu0
    %2553 = vst [vmem:[%s9] sm:$0x1] %v2548
    // Predicated region
    $region58: #{_lambda_.1} parent=1 // pred_check
      _
    $region59: #{_lambda_.1} parent=1 // pred_check_branch
      %2555 = sbr.rel (0) target = $region61
    $region60: #{_lambda_.1} parent=1 // pred_region
      _
    $region61: #{_lambda_.1} parent=1 // pred_fallthru
      _
    // Predicated region
    $region62: #{_lambda_.1} parent=1 // pred_check
      _
    $region63: #{_lambda_.1} parent=1 // pred_check_branch
      %2557 = sbr.rel (0) target = $region65
    $region64: #{_lambda_.1} parent=1 // pred_region
      _
    $region65: #{_lambda_.1} parent=1 // pred_fallthru
      _
    %2558 = vsyncpa [#allocation4], 1
    %2559 = vsyncpa [#allocation6], 1
    %2560 = vsyncpa [#allocation9], 1

</llo_original>
